<compile_context>
chip_gen: v7x
topology: tpu7x:2x2x1
jax: 0.10.0
libtpu: 0.0.40
codegen_flags: <defaults>
</compile_context>

<pallas_src>
import numpy as np
import jax
import jax.numpy as jnp
from jax import lax
from jax.experimental import pallas as pl
from jax.experimental.pallas import tpu as pltpu


def _bilinear_matrix_np(dst, src):
    """(dst, src) 1-D bilinear interpolation matrix, align_corners=True."""
    m = np.zeros((dst, src), dtype=np.float32)
    if src == 1:
        m[:, 0] = 1.0
        return m
    scale = (src - 1) / (dst - 1)
    for i in range(dst):
        s = i * scale
        i0 = min(int(np.floor(s)), src - 1)
        i1 = min(i0 + 1, src - 1)
        f = s - i0
        m[i, i0] += 1.0 - f
        m[i, i1] += f
    return m


def _two_tap_weights(up):
    """Decompose a x2 align_corners=True bilinear matrix (2n, n) into 2-tap blends.

    Returns (prev_e, curr_e, curr_o, next_o), each (n,):
      out[2m]   = prev_e[m] * z[m-1] + curr_e[m] * z[m]
      out[2m+1] = curr_o[m] * z[m]   + next_o[m] * z[m+1]
    """
    n = up.shape[1]
    prev_e = np.zeros(n, np.float32)
    curr_e = np.zeros(n, np.float32)
    curr_o = np.zeros(n, np.float32)
    next_o = np.zeros(n, np.float32)
    for m in range(n):
        curr_e[m] = up[2 * m, m]
        if m > 0:
            prev_e[m] = up[2 * m, m - 1]
        curr_o[m] = up[2 * m + 1, m]
        if m < n - 1:
            next_o[m] = up[2 * m + 1, m + 1]
    rec = np.zeros_like(up)
    for m in range(n):
        rec[2 * m, m] += curr_e[m]
        if m > 0:
            rec[2 * m, m - 1] += prev_e[m]
        rec[2 * m + 1, m] += curr_o[m]
        if m < n - 1:
            rec[2 * m + 1, m + 1] += next_o[m]
    assert np.allclose(rec, up), "x2 align_corners bilinear must be 2-tap"
    return prev_e, curr_e, curr_o, next_o


def deconv_forward(x, w1, b1, gamma, beta, running_mean, running_var, w2, b2,
                   eps=1e-5):
    """deconv.forward (transpose=False) as a single fused Pallas TPU kernel."""
    N, Cin, H, W = x.shape
    Cmid = w1.shape[0]
    Cout = w2.shape[0]
    HW = H * W
    Ho, Wo = 2 * H, 2 * W
    f32 = jnp.float32
    bf16 = jnp.bfloat16

    # ---- parameter repacking: trivial reshapes/folds (constants under jit) ----
    s1 = (gamma / jnp.sqrt(running_var + eps)).astype(f32)          # (Cmid,)
    t1 = (beta + (b1 - running_mean) * s1).astype(f32)              # (Cmid,)
    bn = jnp.stack([s1, t1], axis=0)                                # (2, Cmid)
    w1col = jnp.transpose(w1, (2, 3, 1, 0)).reshape(9 * Cin, Cmid).astype(bf16)
    w2m = jnp.transpose(w2.reshape(Cout, Cmid), (1, 0)).astype(bf16)  # (Cmid, Cout)
    b2r = b2.reshape(1, Cout).astype(f32)

    # 2-tap blend weights of the x2 align_corners=True bilinear upsample,
    # broadcast to the flattened (H*W,) row index (w-taps vary with w, h-taps with h).
    wpe, wce, wco, wno = _two_tap_weights(_bilinear_matrix_np(Wo, W))
    hpe, hce, hco, hno = _two_tap_weights(_bilinear_matrix_np(Ho, H))
    wvec = np.stack([np.tile(wpe, H), np.tile(wce, H),
                     np.tile(wco, H), np.tile(wno, H),
                     np.repeat(hpe, W), np.repeat(hce, W),
                     np.repeat(hco, W), np.repeat(hno, W)], axis=1)
    wvec = jnp.asarray(wvec, dtype=f32)                             # (H*W, 8)

    # ---- im2col (one-time wrapper-side layout plumbing) ----
    xp = jnp.pad(x.astype(f32), ((0, 0), (0, 0), (1, 1), (1, 1)))
    taps = [xp[:, :, dy:dy + H, dx:dx + W] for dy in range(3) for dx in range(3)]
    xcol = jnp.stack(taps, axis=2)                                  # (N, Cin, 9, H, W)
    xcol = xcol.transpose(0, 3, 4, 2, 1).reshape(N, HW, 9 * Cin).astype(bf16)

    def _down(a, k):   # row r <- row r-k; first k rows zero
        return jnp.concatenate(
            [jnp.zeros((k, a.shape[1]), a.dtype), a[:-k, :]], axis=0)

    def _up(a, k):     # row r <- row r+k; last k rows zero
        return jnp.concatenate(
            [a[k:, :], jnp.zeros((k, a.shape[1]), a.dtype)], axis=0)

    def _kernel(x_ref, w1_ref, bn_ref, w2_ref, b2_ref, wv_ref, out_ref):
        # 3x3 conv as one im2col matmul: bf16 operands, f32 accumulation (MXU).
        y = jnp.dot(x_ref[0], w1_ref[...], preferred_element_type=f32)  # (HW, Cmid)
        # conv1 bias + eval-mode BatchNorm folded to scale/shift, then ReLU (f32 VPU).
        bnv = bn_ref[...]
        y = jnp.maximum(y * bnv[0:1, :] + bnv[1:2, :], 0.0)
        # 1x1 conv (MXU), f32 accumulation.
        z = jnp.dot(y.astype(bf16), w2_ref[...],
                    preferred_element_type=f32) + b2_ref[...]           # (HW, Cout)
        # x2 bilinear upsample (align_corners=True): 2-tap VPU blends in both
        # directions; boundary-wrap weights are exactly zero so plain shifted
        # views are safe.  Even/odd outputs are stored de-interleaved; the
        # wrapper's (mandatory) NCHW permute re-interleaves them for free.
        wv = wv_ref[...]
        c = lambda i: wv[:, i:i + 1]                                    # (HW, 1)
        e = c(0) * _down(z, 1) + c(1) * z        # even output columns
        o = c(2) * z + c(3) * _up(z, 1)          # odd output columns
        out_ref[0, 0, 0] = c(4) * _down(e, W) + c(5) * e   # (ho even, wo even)
        out_ref[0, 1, 0] = c(6) * e + c(7) * _up(e, W)     # (ho odd,  wo even)
        out_ref[0, 0, 1] = c(4) * _down(o, W) + c(5) * o   # (ho even, wo odd)
        out_ref[0, 1, 1] = c(6) * o + c(7) * _up(o, W)     # (ho odd,  wo odd)

    out_q = pl.pallas_call(
        _kernel,
        out_shape=jax.ShapeDtypeStruct((N, 2, 2, HW, Cout), f32),
        grid=(N,),
        in_specs=[
            pl.BlockSpec((1, HW, 9 * Cin), lambda n: (n, 0, 0)),
            pl.BlockSpec((9 * Cin, Cmid), lambda n: (0, 0)),
            pl.BlockSpec((2, Cmid), lambda n: (0, 0)),
            pl.BlockSpec((Cmid, Cout), lambda n: (0, 0)),
            pl.BlockSpec((1, Cout), lambda n: (0, 0)),
            pl.BlockSpec((HW, 8), lambda n: (0, 0)),
        ],
        out_specs=pl.BlockSpec((1, 2, 2, HW, Cout), lambda n: (n, 0, 0, 0, 0)),
        compiler_params=pltpu.CompilerParams(
            dimension_semantics=("parallel",),       # batch axis -> both TCs on v7x
            vmem_limit_bytes=32 * 1024 * 1024,
        ),
    )(xcol, w1col, bn, w2m, b2r, wvec)

    # (N, q, p, H*W, Cout) -> NCHW with ho = 2*hh + q, wo = 2*m + p.
    # TODO(synk): if the consumer accepts NHWC, this transpose can be dropped.
    out = out_q.reshape(N, 2, 2, H, W, Cout)
    out = out.transpose(0, 5, 3, 1, 4, 2).reshape(N, Cout, Ho, Wo)
    return out


# ---------------------------- pure-JAX reference ----------------------------

def _upsample_bilinear_x2_ref(x):
    N, C, H, W = x.shape
    Ho, Wo = 2 * H, 2 * W

    def coords(src, dst):
        s = jnp.arange(dst, dtype=jnp.float32) * ((src - 1) / (dst - 1))
        lo = jnp.clip(jnp.floor(s).astype(jnp.int32), 0, src - 1)
        hi = jnp.minimum(lo + 1, src - 1)
        return lo, hi, s - lo.astype(jnp.float32)

    h_lo, h_hi, fh = coords(H, Ho)
    w_lo, w_hi, fw = coords(W, Wo)
    top = x[:, :, h_lo, :]
    bot = x[:, :, h_hi, :]
    v = top * (1.0 - fh)[None, None, :, None] + bot * fh[None, None, :, None]
    left = v[:, :, :, w_lo]
    right = v[:, :, :, w_hi]
    return left * (1.0 - fw)[None, None, None, :] + right * fw[None, None, None, :]


def deconv_ref(x, w1, b1, gamma, beta, running_mean, running_var, w2, b2,
               eps=1e-5):
    hi = lax.Precision.HIGHEST
    y = lax.conv_general_dilated(x, w1, (1, 1), ((1, 1), (1, 1)),
                                 dimension_numbers=("NCHW", "OIHW", "NCHW"),
                                 precision=hi)
    y = y + b1[None, :, None, None]
    y = (y - running_mean[None, :, None, None]) / jnp.sqrt(
        running_var[None, :, None, None] + eps)
    y = y * gamma[None, :, None, None] + beta[None, :, None, None]
    y = jnp.maximum(y, 0.0)
    z = lax.conv_general_dilated(y, w2, (1, 1), "VALID",
                                 dimension_numbers=("NCHW", "OIHW", "NCHW"),
                                 precision=hi) + b2[None, :, None, None]
    return _upsample_bilinear_x2_ref(z)


if __name__ == "__main__":
    key = jax.random.PRNGKey(0)
    ks = jax.random.split(key, 10)
    N, Cin, Cmid, Cout, H, W = 2, 4, 8, 4, 16, 16

    x = jax.random.normal(ks[0], (N, Cin, H, W), dtype=jnp.float32)
    w1 = jax.random.normal(ks[1], (Cmid, Cin, 3, 3), dtype=jnp.float32) * 0.2
    b1 = jax.random.normal(ks[2], (Cmid,), dtype=jnp.float32) * 0.1
    gamma = jax.random.uniform(ks[3], (Cmid,), minval=0.5, maxval=1.5)
    beta = jax.random.normal(ks[4], (Cmid,), dtype=jnp.float32) * 0.1
    running_mean = jax.random.normal(ks[5], (Cmid,), dtype=jnp.float32) * 0.1
    running_var = jax.random.uniform(ks[6], (Cmid,), minval=0.5, maxval=1.5)
    w2 = jax.random.normal(ks[7], (Cout, Cmid, 1, 1), dtype=jnp.float32) * 0.3
    b2 = jax.random.normal(ks[8], (Cout,), dtype=jnp.float32) * 0.1

    fwd = jax.jit(deconv_forward)
    out = jax.block_until_ready(
        fwd(x, w1, b1, gamma, beta, running_mean, running_var, w2, b2))
    ref = jax.block_until_ready(
        deconv_ref(x, w1, b1, gamma, beta, running_mean, running_var, w2, b2))

    assert out.shape == (N, Cout, 2 * H, 2 * W), out.shape
    # Tolerance sized for single-pass bf16 MXU operand rounding (per the perf
    # review: bf16 operands + f32 accumulation instead of precision=HIGHEST).
    max_err = float(jnp.max(jnp.abs(out - ref)))
    assert jnp.allclose(out, ref, rtol=3e-2, atol=3e-2), ("max_abs_err", max_err)
    print("KERNEL_OK")
</pallas_src>

<mosaic_0001>
module attributes {stable_mosaic.version = 11 : i64} {
  func.func @_kernel(%arg0: i32, %arg1: memref<1x256x36xbf16, #tpu.memory_space<vmem>>, %arg2: memref<36x8xbf16, #tpu.memory_space<vmem>>, %arg3: memref<2x8xf32, #tpu.memory_space<vmem>>, %arg4: memref<8x4xbf16, #tpu.memory_space<vmem>>, %arg5: memref<1x4xf32, #tpu.memory_space<vmem>>, %arg6: memref<256x8xf32, #tpu.memory_space<vmem>>, %arg7: memref<1x2x2x256x4xf32, #tpu.memory_space<vmem>>) attributes {dimension_semantics = [#tpu.dimension_semantics<parallel>], iteration_bounds = array<i64: 2>, scalar_prefetch = 0 : i64, scratch_operands = 0 : i64, tpu.core_type = #tpu.core_type<tc>, window_params = [{transform_indices = @transform_0, window_bounds = array<i64: 1, 256, 36>}, {pipeline_mode = #tpu.pipeline_mode<synchronous>, transform_indices = @transform_1, window_bounds = array<i64: 36, 8>}, {pipeline_mode = #tpu.pipeline_mode<synchronous>, transform_indices = @transform_2, window_bounds = array<i64: 2, 8>}, {pipeline_mode = #tpu.pipeline_mode<synchronous>, transform_indices = @transform_3, window_bounds = array<i64: 8, 4>}, {pipeline_mode = #tpu.pipeline_mode<synchronous>, transform_indices = @transform_4, window_bounds = array<i64: 1, 4>}, {pipeline_mode = #tpu.pipeline_mode<synchronous>, transform_indices = @transform_5, window_bounds = array<i64: 256, 8>}, {transform_indices = @transform_6, window_bounds = array<i64: 1, 2, 2, 256, 4>}]} {
    %c0 = arith.constant 0 : index
    %c0_0 = arith.constant 0 : index
    %c0_1 = arith.constant 0 : index
    %0 = vector.load %arg1[%c0, %c0_0, %c0_1] : memref<1x256x36xbf16, #tpu.memory_space<vmem>>, vector<1x256x36xbf16>
    %1 = vector.shape_cast %0 : vector<1x256x36xbf16> to vector<256x36xbf16>
    %c0_2 = arith.constant 0 : index
    %c0_3 = arith.constant 0 : index
    %2 = vector.load %arg2[%c0_2, %c0_3] : memref<36x8xbf16, #tpu.memory_space<vmem>>, vector<36x8xbf16>
    %cst = arith.constant dense<0.000000e+00> : vector<256x8xf32>
    %3 = tpu.matmul %1, %2, %cst {dimension_numbers = #tpu.dot_dimension_numbers<[1], [0], [0], [1], [0, 0, 1, 1], [], []>} : vector<256x36xbf16>, vector<36x8xbf16>, vector<256x8xf32> -> vector<256x8xf32>
    %c0_4 = arith.constant 0 : index
    %c0_5 = arith.constant 0 : index
    %4 = vector.load %arg3[%c0_4, %c0_5] : memref<2x8xf32, #tpu.memory_space<vmem>>, vector<2x8xf32>
    %5 = vector.extract_strided_slice %4 {offsets = [0, 0], sizes = [1, 8], strides = [1, 1]} : vector<2x8xf32> to vector<1x8xf32>
    %6 = vector.broadcast %5 : vector<1x8xf32> to vector<256x8xf32>
    %7 = arith.mulf %3, %6 : vector<256x8xf32>
    %8 = vector.extract_strided_slice %4 {offsets = [1, 0], sizes = [1, 8], strides = [1, 1]} : vector<2x8xf32> to vector<1x8xf32>
    %9 = vector.broadcast %8 : vector<1x8xf32> to vector<256x8xf32>
    %10 = arith.addf %7, %9 : vector<256x8xf32>
    %cst_6 = arith.constant 0.000000e+00 : f32
    %11 = vector.broadcast %cst_6 : f32 to vector<256x8xf32>
    %12 = arith.maximumf %10, %11 : vector<256x8xf32>
    %13 = arith.truncf %12 : vector<256x8xf32> to vector<256x8xbf16>
    %c0_7 = arith.constant 0 : index
    %c0_8 = arith.constant 0 : index
    %14 = vector.load %arg4[%c0_7, %c0_8] : memref<8x4xbf16, #tpu.memory_space<vmem>>, vector<8x4xbf16>
    %cst_9 = arith.constant dense<0.000000e+00> : vector<256x4xf32>
    %15 = tpu.matmul %13, %14, %cst_9 {dimension_numbers = #tpu.dot_dimension_numbers<[1], [0], [0], [1], [0, 0, 1, 1], [], []>} : vector<256x8xbf16>, vector<8x4xbf16>, vector<256x4xf32> -> vector<256x4xf32>
    %c0_10 = arith.constant 0 : index
    %c0_11 = arith.constant 0 : index
    %16 = vector.load %arg5[%c0_10, %c0_11] : memref<1x4xf32, #tpu.memory_space<vmem>>, vector<1x4xf32>
    %17 = vector.broadcast %16 : vector<1x4xf32> to vector<256x4xf32>
    %18 = arith.addf %15, %17 : vector<256x4xf32>
    %c0_12 = arith.constant 0 : index
    %c0_13 = arith.constant 0 : index
    %19 = vector.load %arg6[%c0_12, %c0_13] : memref<256x8xf32, #tpu.memory_space<vmem>>, vector<256x8xf32>
    %20 = vector.extract_strided_slice %19 {offsets = [0, 0], sizes = [256, 1], strides = [1, 1]} : vector<256x8xf32> to vector<256x1xf32>
    %cst_14 = arith.constant 0.000000e+00 : f32
    %21 = vector.broadcast %cst_14 : f32 to vector<1x4xf32>
    %22 = vector.extract_strided_slice %18 {offsets = [0, 0], sizes = [255, 4], strides = [1, 1]} : vector<256x4xf32> to vector<255x4xf32>
    %23 = tpu.concatenate %21, %22 in 0 : vector<1x4xf32>, vector<255x4xf32> -> vector<256x4xf32>
    %24 = vector.broadcast %20 : vector<256x1xf32> to vector<256x4xf32>
    %25 = arith.mulf %24, %23 : vector<256x4xf32>
    %26 = vector.extract_strided_slice %19 {offsets = [0, 1], sizes = [256, 1], strides = [1, 1]} : vector<256x8xf32> to vector<256x1xf32>
    %27 = vector.broadcast %26 : vector<256x1xf32> to vector<256x4xf32>
    %28 = arith.mulf %27, %18 : vector<256x4xf32>
    %29 = arith.addf %25, %28 : vector<256x4xf32>
    %30 = vector.extract_strided_slice %19 {offsets = [0, 2], sizes = [256, 1], strides = [1, 1]} : vector<256x8xf32> to vector<256x1xf32>
    %31 = vector.broadcast %30 : vector<256x1xf32> to vector<256x4xf32>
    %32 = arith.mulf %31, %18 : vector<256x4xf32>
    %33 = vector.extract_strided_slice %19 {offsets = [0, 3], sizes = [256, 1], strides = [1, 1]} : vector<256x8xf32> to vector<256x1xf32>
    %34 = vector.extract_strided_slice %18 {offsets = [1, 0], sizes = [255, 4], strides = [1, 1]} : vector<256x4xf32> to vector<255x4xf32>
    %cst_15 = arith.constant 0.000000e+00 : f32
    %35 = vector.broadcast %cst_15 : f32 to vector<1x4xf32>
    %36 = tpu.concatenate %34, %35 in 0 : vector<255x4xf32>, vector<1x4xf32> -> vector<256x4xf32>
    %37 = vector.broadcast %33 : vector<256x1xf32> to vector<256x4xf32>
    %38 = arith.mulf %37, %36 : vector<256x4xf32>
    %39 = arith.addf %32, %38 : vector<256x4xf32>
    %40 = vector.extract_strided_slice %19 {offsets = [0, 4], sizes = [256, 1], strides = [1, 1]} : vector<256x8xf32> to vector<256x1xf32>
    %cst_16 = arith.constant 0.000000e+00 : f32
    %41 = vector.broadcast %cst_16 : f32 to vector<16x4xf32>
    %42 = vector.extract_strided_slice %29 {offsets = [0, 0], sizes = [240, 4], strides = [1, 1]} : vector<256x4xf32> to vector<240x4xf32>
    %43 = tpu.concatenate %41, %42 in 0 : vector<16x4xf32>, vector<240x4xf32> -> vector<256x4xf32>
    %44 = vector.broadcast %40 : vector<256x1xf32> to vector<256x4xf32>
    %45 = arith.mulf %44, %43 : vector<256x4xf32>
    %46 = vector.extract_strided_slice %19 {offsets = [0, 5], sizes = [256, 1], strides = [1, 1]} : vector<256x8xf32> to vector<256x1xf32>
    %47 = vector.broadcast %46 : vector<256x1xf32> to vector<256x4xf32>
    %48 = arith.mulf %47, %29 : vector<256x4xf32>
    %49 = arith.addf %45, %48 : vector<256x4xf32>
    %c0_17 = arith.constant 0 : index
    %c0_18 = arith.constant 0 : index
    %c0_19 = arith.constant 0 : index
    %c0_20 = arith.constant 0 : index
    %c0_21 = arith.constant 0 : index
    %50 = vector.load %arg7[%c0_17, %c0_18, %c0_19, %c0_20, %c0_21] : memref<1x2x2x256x4xf32, #tpu.memory_space<vmem>>, vector<1x1x1x256x4xf32>
    %51 = vector.shape_cast %50 : vector<1x1x1x256x4xf32> to vector<256x4xf32>
    %52 = vector.shape_cast %49 : vector<256x4xf32> to vector<1x1x1x256x4xf32>
    tpu.vector_store %arg7[%c0_17, %c0_18, %c0_19, %c0_20, %c0_21], %52 {strides = array<i32>} : memref<1x2x2x256x4xf32, #tpu.memory_space<vmem>>, vector<1x1x1x256x4xf32>,
    %53 = vector.extract_strided_slice %19 {offsets = [0, 6], sizes = [256, 1], strides = [1, 1]} : vector<256x8xf32> to vector<256x1xf32>
    %54 = vector.broadcast %53 : vector<256x1xf32> to vector<256x4xf32>
    %55 = arith.mulf %54, %29 : vector<256x4xf32>
    %56 = vector.extract_strided_slice %19 {offsets = [0, 7], sizes = [256, 1], strides = [1, 1]} : vector<256x8xf32> to vector<256x1xf32>
    %57 = vector.extract_strided_slice %29 {offsets = [16, 0], sizes = [240, 4], strides = [1, 1]} : vector<256x4xf32> to vector<240x4xf32>
    %cst_22 = arith.constant 0.000000e+00 : f32
    %58 = vector.broadcast %cst_22 : f32 to vector<16x4xf32>
    %59 = tpu.concatenate %57, %58 in 0 : vector<240x4xf32>, vector<16x4xf32> -> vector<256x4xf32>
    %60 = vector.broadcast %56 : vector<256x1xf32> to vector<256x4xf32>
    %61 = arith.mulf %60, %59 : vector<256x4xf32>
    %62 = arith.addf %55, %61 : vector<256x4xf32>
    %c0_23 = arith.constant 0 : index
    %c1 = arith.constant 1 : index
    %c0_24 = arith.constant 0 : index
    %c0_25 = arith.constant 0 : index
    %c0_26 = arith.constant 0 : index
    %63 = vector.load %arg7[%c0_23, %c1, %c0_24, %c0_25, %c0_26] : memref<1x2x2x256x4xf32, #tpu.memory_space<vmem>>, vector<1x1x1x256x4xf32>
    %64 = vector.shape_cast %63 : vector<1x1x1x256x4xf32> to vector<256x4xf32>
    %65 = vector.shape_cast %62 : vector<256x4xf32> to vector<1x1x1x256x4xf32>
    tpu.vector_store %arg7[%c0_23, %c1, %c0_24, %c0_25, %c0_26], %65 {strides = array<i32>} : memref<1x2x2x256x4xf32, #tpu.memory_space<vmem>>, vector<1x1x1x256x4xf32>,
    %66 = vector.extract_strided_slice %19 {offsets = [0, 4], sizes = [256, 1], strides = [1, 1]} : vector<256x8xf32> to vector<256x1xf32>
    %cst_27 = arith.constant 0.000000e+00 : f32
    %67 = vector.broadcast %cst_27 : f32 to vector<16x4xf32>
    %68 = vector.extract_strided_slice %39 {offsets = [0, 0], sizes = [240, 4], strides = [1, 1]} : vector<256x4xf32> to vector<240x4xf32>
    %69 = tpu.concatenate %67, %68 in 0 : vector<16x4xf32>, vector<240x4xf32> -> vector<256x4xf32>
    %70 = vector.broadcast %66 : vector<256x1xf32> to vector<256x4xf32>
    %71 = arith.mulf %70, %69 : vector<256x4xf32>
    %72 = vector.extract_strided_slice %19 {offsets = [0, 5], sizes = [256, 1], strides = [1, 1]} : vector<256x8xf32> to vector<256x1xf32>
    %73 = vector.broadcast %72 : vector<256x1xf32> to vector<256x4xf32>
    %74 = arith.mulf %73, %39 : vector<256x4xf32>
    %75 = arith.addf %71, %74 : vector<256x4xf32>
    %c0_28 = arith.constant 0 : index
    %c0_29 = arith.constant 0 : index
    %c1_30 = arith.constant 1 : index
    %c0_31 = arith.constant 0 : index
    %c0_32 = arith.constant 0 : index
    %76 = vector.load %arg7[%c0_28, %c0_29, %c1_30, %c0_31, %c0_32] : memref<1x2x2x256x4xf32, #tpu.memory_space<vmem>>, vector<1x1x1x256x4xf32>
    %77 = vector.shape_cast %76 : vector<1x1x1x256x4xf32> to vector<256x4xf32>
    %78 = vector.shape_cast %75 : vector<256x4xf32> to vector<1x1x1x256x4xf32>
    tpu.vector_store %arg7[%c0_28, %c0_29, %c1_30, %c0_31, %c0_32], %78 {strides = array<i32>} : memref<1x2x2x256x4xf32, #tpu.memory_space<vmem>>, vector<1x1x1x256x4xf32>,
    %79 = vector.extract_strided_slice %19 {offsets = [0, 6], sizes = [256, 1], strides = [1, 1]} : vector<256x8xf32> to vector<256x1xf32>
    %80 = vector.broadcast %79 : vector<256x1xf32> to vector<256x4xf32>
    %81 = arith.mulf %80, %39 : vector<256x4xf32>
    %82 = vector.extract_strided_slice %19 {offsets = [0, 7], sizes = [256, 1], strides = [1, 1]} : vector<256x8xf32> to vector<256x1xf32>
    %83 = vector.extract_strided_slice %39 {offsets = [16, 0], sizes = [240, 4], strides = [1, 1]} : vector<256x4xf32> to vector<240x4xf32>
    %cst_33 = arith.constant 0.000000e+00 : f32
    %84 = vector.broadcast %cst_33 : f32 to vector<16x4xf32>
    %85 = tpu.concatenate %83, %84 in 0 : vector<240x4xf32>, vector<16x4xf32> -> vector<256x4xf32>
    %86 = vector.broadcast %82 : vector<256x1xf32> to vector<256x4xf32>
    %87 = arith.mulf %86, %85 : vector<256x4xf32>
    %88 = arith.addf %81, %87 : vector<256x4xf32>
    %c0_34 = arith.constant 0 : index
    %c1_35 = arith.constant 1 : index
    %c1_36 = arith.constant 1 : index
    %c0_37 = arith.constant 0 : index
    %c0_38 = arith.constant 0 : index
    %89 = vector.load %arg7[%c0_34, %c1_35, %c1_36, %c0_37, %c0_38] : memref<1x2x2x256x4xf32, #tpu.memory_space<vmem>>, vector<1x1x1x256x4xf32>
    %90 = vector.shape_cast %89 : vector<1x1x1x256x4xf32> to vector<256x4xf32>
    %91 = vector.shape_cast %88 : vector<256x4xf32> to vector<1x1x1x256x4xf32>
    tpu.vector_store %arg7[%c0_34, %c1_35, %c1_36, %c0_37, %c0_38], %91 {strides = array<i32>} : memref<1x2x2x256x4xf32, #tpu.memory_space<vmem>>, vector<1x1x1x256x4xf32>,
    return
  }
  func.func @transform_0(%arg0: i32) -> (i32, i32, i32) {
    %c0_i32 = arith.constant 0 : i32
    %c0_i32_0 = arith.constant 0 : i32
    %c0_i32_1 = arith.constant 0 : i32
    return %arg0, %c0_i32, %c0_i32_0 : i32, i32, i32
  }
  func.func @transform_1(%arg0: i32) -> (i32, i32) {
    %c0_i32 = arith.constant 0 : i32
    %c0_i32_0 = arith.constant 0 : i32
    %c0_i32_1 = arith.constant 0 : i32
    return %c0_i32, %c0_i32_0 : i32, i32
  }
  func.func @transform_2(%arg0: i32) -> (i32, i32) {
    %c0_i32 = arith.constant 0 : i32
    %c0_i32_0 = arith.constant 0 : i32
    %c0_i32_1 = arith.constant 0 : i32
    return %c0_i32, %c0_i32_0 : i32, i32
  }
  func.func @transform_3(%arg0: i32) -> (i32, i32) {
    %c0_i32 = arith.constant 0 : i32
    %c0_i32_0 = arith.constant 0 : i32
    %c0_i32_1 = arith.constant 0 : i32
    return %c0_i32, %c0_i32_0 : i32, i32
  }
  func.func @transform_4(%arg0: i32) -> (i32, i32) {
    %c0_i32 = arith.constant 0 : i32
    %c0_i32_0 = arith.constant 0 : i32
    %c0_i32_1 = arith.constant 0 : i32
    return %c0_i32, %c0_i32_0 : i32, i32
  }
  func.func @transform_5(%arg0: i32) -> (i32, i32) {
    %c0_i32 = arith.constant 0 : i32
    %c0_i32_0 = arith.constant 0 : i32
    %c0_i32_1 = arith.constant 0 : i32
    return %c0_i32, %c0_i32_0 : i32, i32
  }
  func.func @transform_6(%arg0: i32) -> (i32, i32, i32, i32, i32) {
    %c0_i32 = arith.constant 0 : i32
    %c0_i32_0 = arith.constant 0 : i32
    %c0_i32_1 = arith.constant 0 : i32
    %c0_i32_2 = arith.constant 0 : i32
    %c0_i32_3 = arith.constant 0 : i32
    return %arg0, %c0_i32, %c0_i32_0, %c0_i32_1, %c0_i32_2 : i32, i32, i32, i32, i32
  }
}

</mosaic_0001>

<llo_original>
// kernel: deconv_forward.1
$region0: #{deconv_forward.1}
  #allocation0 [shape = 'u32[]', space=smem, size = 0x4, offset = 0x4, fixed_abs, tag = 'smem constant byte address 0x4 - core index']
  #allocation1 [shape = 'u32[144,128]{1,0:T(1,128)}', space=vmem, size = 0x12000, scoped, tag = 'internal scratch']
  %s0 = inlined_call_operand.vmem [shape: bf16[2,256,36], index: 0, kind: input, shape index: {}]
  %s1 = inlined_call_operand.vmem [shape: bf16[36,8], index: 1, kind: input, shape index: {}]
  %s2 = inlined_call_operand.vmem [shape: f32[2,8], index: 2, kind: input, shape index: {}]
  %s3 = inlined_call_operand.vmem [shape: bf16[8,4], index: 3, kind: input, shape index: {}]
  %s4 = inlined_call_operand.vmem [shape: f32[1,4], index: 4, kind: input, shape index: {}]
  %s5 = inlined_call_operand.vmem [shape: f32[256,8], index: 5, kind: input, shape index: {}]
  %s6 = inlined_call_operand.vmem [shape: f32[2,2,2,256,4], index: 6, kind: output, shape index: {}]
  %s7 = sld [smem:[#allocation0]]
  $region57: #{deconv_forward.1} parent=0
    _
  %s9 = ssub.s32 1, %s7
  %s10 = scalar_select 0, %s9, %s7
  loop: start=0, step=1, limit=4
  $region2: #{deconv_forward.1} parent=0 // loop_pre_header
    _
  $region3: #{deconv_forward.1} parent=0 // loop_header
    %s12 = sphi 0, %s16
    %p13 = scmp.ge.s32.totalorder %s12, 4
    %s22 = sphi 0, %s24
    %s25 = sphi 0, %s22
    %s26 = sphi 0, %s25
    %s42 = sphi 0, %s26
    %s46 = sphi 0, %s46
    %s48 = sphi 0, %s46
    %s49 = sphi 0, %s48
    %s63 = sphi 0, %s49
    %s67 = sphi 0, %s67
    %s69 = sphi 0, %s67
    %s70 = sphi 0, %s69
    %s84 = sphi 0, %s70
    %s88 = sphi 0, %s88
    %s90 = sphi 0, %s88
    %s91 = sphi 0, %s90
    %s105 = sphi 0, %s91
    %s109 = sphi 0, %s109
    %s111 = sphi 0, %s109
    %s112 = sphi 0, %s111
    %s126 = sphi 0, %s112
    %s130 = sphi 0, %s130
    %s132 = sphi 0, %s130
    %s133 = sphi 0, %s132
    %s147 = sphi 0, %s133
    %s153 = sphi 0, %s155
    %s156 = sphi 0, %s153
    %s157 = sphi 0, %s156
    %s173 = sphi 0, %s157
  $region4: #{deconv_forward.1} parent=0 // loop_header_branch
    %15 = sbr.rel (%p13) target = $region8
  $region5: #{deconv_forward.1} parent=0 // loop_body
    %s17 = ssub.s32 %s12, 1
    %s18 = ssub.s32 %s12, 2
    %s19 = sadd.s32 %s12, 1
    %s20 = ssub.s32 %s12, %s19
    %p21 = scmp.eq.s32.totalorder %s20, 0
    %s23 = sadd.s32 %s22, 1
    %s24 = scalar_select %p21, %s22, %s23
    %p27 = pneg %p21
    %p28 = scmp.eq.s32.totalorder %s12, 1
    %p29 = por %p27, %p28
    %p30 = scmp.ne.s32.totalorder %s22, %s25
    %p31 = scmp.eq.s32.totalorder %s12, 0
    %p32 = por %p30, %p31
    %p33 = scmp.ne.s32.totalorder %s22, %s25
    %p34 = scmp.eq.s32.totalorder %s17, 1
    %p35 = por %p33, %p34
    %p36 = scmp.ne.s32.totalorder %s25, %s26
    %p37 = scmp.eq.s32.totalorder %s17, 0
    %p38 = por %p36, %p37
    %p39 = scmp.ne.s32.totalorder %s25, %s26
    %p40 = scmp.eq.s32.totalorder %s18, 1
    %p41 = por %p39, %p40
    %p43 = scmp.ne.s32.totalorder %s26, %s42
    %p44 = scmp.eq.s32.totalorder %s18, 0
    %p45 = por %p43, %p44
    %s47 = sadd.s32 %s46, 1
    %p50 = scmp.eq.s32.totalorder %s12, 1
    %p51 = scmp.ne.s32.totalorder %s46, %s48
    %p52 = scmp.eq.s32.totalorder %s12, 0
    %p53 = por %p51, %p52
    %p54 = scmp.ne.s32.totalorder %s46, %s48
    %p55 = scmp.eq.s32.totalorder %s17, 1
    %p56 = por %p54, %p55
    %p57 = scmp.ne.s32.totalorder %s48, %s49
    %p58 = scmp.eq.s32.totalorder %s17, 0
    %p59 = por %p57, %p58
    %p60 = scmp.ne.s32.totalorder %s48, %s49
    %p61 = scmp.eq.s32.totalorder %s18, 1
    %p62 = por %p60, %p61
    %p64 = scmp.ne.s32.totalorder %s49, %s63
    %p65 = scmp.eq.s32.totalorder %s18, 0
    %p66 = por %p64, %p65
    %s68 = sadd.s32 %s67, 1
    %p71 = scmp.eq.s32.totalorder %s12, 1
    %p72 = scmp.ne.s32.totalorder %s67, %s69
    %p73 = scmp.eq.s32.totalorder %s12, 0
    %p74 = por %p72, %p73
    %p75 = scmp.ne.s32.totalorder %s67, %s69
    %p76 = scmp.eq.s32.totalorder %s17, 1
    %p77 = por %p75, %p76
    %p78 = scmp.ne.s32.totalorder %s69, %s70
    %p79 = scmp.eq.s32.totalorder %s17, 0
    %p80 = por %p78, %p79
    %p81 = scmp.ne.s32.totalorder %s69, %s70
    %p82 = scmp.eq.s32.totalorder %s18, 1
    %p83 = por %p81, %p82
    %p85 = scmp.ne.s32.totalorder %s70, %s84
    %p86 = scmp.eq.s32.totalorder %s18, 0
    %p87 = por %p85, %p86
    %s89 = sadd.s32 %s88, 1
    %p92 = scmp.eq.s32.totalorder %s12, 1
    %p93 = scmp.ne.s32.totalorder %s88, %s90
    %p94 = scmp.eq.s32.totalorder %s12, 0
    %p95 = por %p93, %p94
    %p96 = scmp.ne.s32.totalorder %s88, %s90
    %p97 = scmp.eq.s32.totalorder %s17, 1
    %p98 = por %p96, %p97
    %p99 = scmp.ne.s32.totalorder %s90, %s91
    %p100 = scmp.eq.s32.totalorder %s17, 0
    %p101 = por %p99, %p100
    %p102 = scmp.ne.s32.totalorder %s90, %s91
    %p103 = scmp.eq.s32.totalorder %s18, 1
    %p104 = por %p102, %p103
    %p106 = scmp.ne.s32.totalorder %s91, %s105
    %p107 = scmp.eq.s32.totalorder %s18, 0
    %p108 = por %p106, %p107
    %s110 = sadd.s32 %s109, 1
    %p113 = scmp.eq.s32.totalorder %s12, 1
    %p114 = scmp.ne.s32.totalorder %s109, %s111
    %p115 = scmp.eq.s32.totalorder %s12, 0
    %p116 = por %p114, %p115
    %p117 = scmp.ne.s32.totalorder %s109, %s111
    %p118 = scmp.eq.s32.totalorder %s17, 1
    %p119 = por %p117, %p118
    %p120 = scmp.ne.s32.totalorder %s111, %s112
    %p121 = scmp.eq.s32.totalorder %s17, 0
    %p122 = por %p120, %p121
    %p123 = scmp.ne.s32.totalorder %s111, %s112
    %p124 = scmp.eq.s32.totalorder %s18, 1
    %p125 = por %p123, %p124
    %p127 = scmp.ne.s32.totalorder %s112, %s126
    %p128 = scmp.eq.s32.totalorder %s18, 0
    %p129 = por %p127, %p128
    %s131 = sadd.s32 %s130, 1
    %p134 = scmp.eq.s32.totalorder %s12, 1
    %p135 = scmp.ne.s32.totalorder %s130, %s132
    %p136 = scmp.eq.s32.totalorder %s12, 0
    %p137 = por %p135, %p136
    %p138 = scmp.ne.s32.totalorder %s130, %s132
    %p139 = scmp.eq.s32.totalorder %s17, 1
    %p140 = por %p138, %p139
    %p141 = scmp.ne.s32.totalorder %s132, %s133
    %p142 = scmp.eq.s32.totalorder %s17, 0
    %p143 = por %p141, %p142
    %p144 = scmp.ne.s32.totalorder %s132, %s133
    %p145 = scmp.eq.s32.totalorder %s18, 1
    %p146 = por %p144, %p145
    %p148 = scmp.ne.s32.totalorder %s133, %s147
    %p149 = scmp.eq.s32.totalorder %s18, 0
    %p150 = por %p148, %p149
    %s151 = ssub.s32 %s12, %s19
    %p152 = scmp.eq.s32.totalorder %s151, 0
    %s154 = sadd.s32 %s153, 1
    %s155 = scalar_select %p152, %s153, %s154
    %p158 = pneg %p152
    %p159 = scmp.eq.s32.totalorder %s12, 1
    %p160 = por %p158, %p159
    %p161 = scmp.ne.s32.totalorder %s153, %s156
    %p162 = scmp.eq.s32.totalorder %s12, 0
    %p163 = por %p161, %p162
    %p164 = scmp.ne.s32.totalorder %s153, %s156
    %p165 = scmp.eq.s32.totalorder %s17, 1
    %p166 = por %p164, %p165
    %p167 = scmp.ne.s32.totalorder %s156, %s157
    %p168 = scmp.eq.s32.totalorder %s17, 0
    %p169 = por %p167, %p168
    %p170 = scmp.ne.s32.totalorder %s156, %s157
    %p171 = scmp.eq.s32.totalorder %s18, 1
    %p172 = por %p170, %p171
    %p174 = scmp.ne.s32.totalorder %s157, %s173
    %p175 = scmp.eq.s32.totalorder %s18, 0
    %p176 = por %p174, %p175
    %p177 = scmp.le.s32.totalorder 1, %s12
    %p178 = scmp.lt.s32.totalorder %s12, 3
    %p179 = pnand %p177, %p178
    %p180 = pneg %p179
    // Predicated region
    $region9: #{deconv_forward.1} parent=5 // pred_check
      _
    $region10: #{deconv_forward.1} parent=5 // pred_check_branch
      %182 = sbr.rel (%p179) target = $region12
    $region11: #{deconv_forward.1} parent=5 // pred_region
      %s183 = ssub.s32 %s12, 1
      // Predicated region
      $region13: #{deconv_forward.1} parent=11 // pred_check
        %p184 = pneg %p59
      $region14: #{deconv_forward.1} parent=11 // pred_check_branch
        %186 = sbr.rel (%p184) target = $region16
      $region15: #{deconv_forward.1} parent=11 // pred_region
        _
      $region16: #{deconv_forward.1} parent=11 // pred_fallthru
        _
      // Predicated region
      $region17: #{deconv_forward.1} parent=11 // pred_check
        %p187 = pneg %p80
      $region18: #{deconv_forward.1} parent=11 // pred_check_branch
        %189 = sbr.rel (%p187) target = $region20
      $region19: #{deconv_forward.1} parent=11 // pred_region
        _
      $region20: #{deconv_forward.1} parent=11 // pred_fallthru
        _
      // Predicated region
      $region21: #{deconv_forward.1} parent=11 // pred_check
        %p190 = pneg %p101
      $region22: #{deconv_forward.1} parent=11 // pred_check_branch
        %192 = sbr.rel (%p190) target = $region24
      $region23: #{deconv_forward.1} parent=11 // pred_region
        _
      $region24: #{deconv_forward.1} parent=11 // pred_fallthru
        _
      // Predicated region
      $region25: #{deconv_forward.1} parent=11 // pred_check
        %p193 = pneg %p122
      $region26: #{deconv_forward.1} parent=11 // pred_check_branch
        %195 = sbr.rel (%p193) target = $region28
      $region27: #{deconv_forward.1} parent=11 // pred_region
        _
      $region28: #{deconv_forward.1} parent=11 // pred_fallthru
        _
      // Predicated region
      $region29: #{deconv_forward.1} parent=11 // pred_check
        %p196 = pneg %p143
      $region30: #{deconv_forward.1} parent=11 // pred_check_branch
        %198 = sbr.rel (%p196) target = $region32
      $region31: #{deconv_forward.1} parent=11 // pred_region
        _
      $region32: #{deconv_forward.1} parent=11 // pred_fallthru
        _
    $region12: #{deconv_forward.1} parent=5 // pred_fallthru
      _
    %p199 = scmp.lt.s32.totalorder %s12, 2
    // Predicated region
    $region33: #{deconv_forward.1} parent=5 // pred_check
      %p200 = pneg %p199
    $region34: #{deconv_forward.1} parent=5 // pred_check_branch
      %202 = sbr.rel (%p200) target = $region36
    $region35: #{deconv_forward.1} parent=5 // pred_region
      // Predicated region
      $region37: #{deconv_forward.1} parent=35 // pred_check
        %p203 = pneg %p32
      $region38: #{deconv_forward.1} parent=35 // pred_check_branch
        %205 = sbr.rel (%p203) target = $region40
      $region39: #{deconv_forward.1} parent=35 // pred_region
        %p206 = scmp.lt.s32.totalorder %s12, 1
        %s207 = scalar_select %p206, %s12, 1
        %s208 = smul.addr %s207, 32
        %s209 = smul.addr %s208, 4
        %s210 = scalar_lea.vmem %s0, %s209
      $region40: #{deconv_forward.1} parent=35 // pred_fallthru
        _
    $region36: #{deconv_forward.1} parent=5 // pred_fallthru
      _
    %p211 = scmp.le.s32.totalorder 1, %s12
    %p212 = scmp.lt.s32.totalorder %s12, 3
    %p213 = pnand %p211, %p212
    %p214 = pneg %p213
    // Predicated region
    $region41: #{deconv_forward.1} parent=5 // pred_check
      _
    $region42: #{deconv_forward.1} parent=5 // pred_check_branch
      %216 = sbr.rel (%p213) target = $region44
    $region43: #{deconv_forward.1} parent=5 // pred_region
      %s217 = ssub.s32 %s12, 1
      %p218 = scmp.lt.s32.totalorder %s17, 1
      %s219 = scalar_select %p218, %s17, 1
      %s220 = smul.addr %s219, 32
      %s221 = smul.addr %s220, 4
      %s222 = scalar_lea.vmem %s0, %s221
      %p223 = pneg %p38
      %p224 = pneg %p35
      %p225 = pneg %p59
      %p226 = pneg %p56
      %p227 = pneg %p80
      %p228 = pneg %p77
      %p229 = pneg %p101
      %p230 = pneg %p98
      %p231 = pneg %p122
      %p232 = pneg %p119
      %p233 = pneg %p143
      %p234 = pneg %p140
      %p235 = pneg %p169
      %p236 = pneg %p166
      %p237 = scmp.lt.s32.totalorder %s17, 1
      %s238 = scalar_select %p237, %s17, 1
      %s239 = smul.addr %s238, 128
      %s240 = smul.addr %s239, 8
      %s241 = scalar_lea.vmem %s6, %s240
      %p242 = scmp.lt.s32.totalorder %s17, 1
      %s243 = scalar_select %p242, %s17, 1
      %s244 = smul.addr %s243, 32
      %s245 = smul.addr %s244, 4
      %s246 = scalar_lea.vmem %s0, %s245
      %p247 = scmp.lt.s32.totalorder %s17, 1
      %s248 = scalar_select %p247, %s17, 1
      %s249 = smul.addr %s248, 128
      %s250 = smul.addr %s249, 8
      %s251 = scalar_lea.vmem %s6, %s250
      %v253 = vld [vmem:[%s246] sm:$0xf]
      %v254 = vld [vmem:[%s246 + $0x4] sm:$0xf]
      %v255 = vld [vmem:[%s246 + $0x8] sm:$0xf]
      %v256 = vld [vmem:[%s246 + $0xc] sm:$0xf]
      %v257 = vld [vmem:[%s246 + $0x10] sm:$0xf]
      %v258 = vld [vmem:[%s246 + $0x14] sm:$0xf]
      %v259 = vld [vmem:[%s246 + $0x18] sm:$0xf]
      %v260 = vld [vmem:[%s246 + $0x1c] sm:$0xf]
      %v261 = vld [vmem:[%s246 + $0x20] sm:$0xf]
      %v262 = vld [vmem:[%s246 + $0x24] sm:$0xf]
      %v263 = vld [vmem:[%s246 + $0x28] sm:$0xf]
      %v264 = vld [vmem:[%s246 + $0x2c] sm:$0xf]
      %v265 = vld [vmem:[%s246 + $0x30] sm:$0xf]
      %v266 = vld [vmem:[%s246 + $0x34] sm:$0xf]
      %v267 = vld [vmem:[%s246 + $0x38] sm:$0xf]
      %v268 = vld [vmem:[%s246 + $0x3c] sm:$0xf]
      %v269 = vld [vmem:[%s246 + $0x40] sm:$0xf]
      %v270 = vld [vmem:[%s246 + $0x44] sm:$0xf]
      %v271 = vld [vmem:[%s246 + $0x48] sm:$0xf]
      %v272 = vld [vmem:[%s246 + $0x4c] sm:$0xf]
      %v273 = vld [vmem:[%s246 + $0x50] sm:$0xf]
      %v274 = vld [vmem:[%s246 + $0x54] sm:$0xf]
      %v275 = vld [vmem:[%s246 + $0x58] sm:$0xf]
      %v276 = vld [vmem:[%s246 + $0x5c] sm:$0xf]
      %v277 = vld [vmem:[%s246 + $0x60] sm:$0xf]
      %v278 = vld [vmem:[%s246 + $0x64] sm:$0xf]
      %v279 = vld [vmem:[%s246 + $0x68] sm:$0xf]
      %v280 = vld [vmem:[%s246 + $0x6c] sm:$0xf]
      %v281 = vld [vmem:[%s246 + $0x70] sm:$0xf]
      %v282 = vld [vmem:[%s246 + $0x74] sm:$0xf]
      %v283 = vld [vmem:[%s246 + $0x78] sm:$0xf]
      %v284 = vld [vmem:[%s246 + $0x7c] sm:$0xf]
      %v285 = vld [vmem:[%s1] sm:$0xf]
      %v286 = vld [vmem:[%s1 + $0x4] sm:$0xf]
      %v287 = vld [vmem:[%s1 + $0x8] sm:$0xf]
      %v288 = vld [vmem:[%s1 + $0xc] sm:$0xf]
      %v289 = vld [vmem:[%s1 + $0x10] sm:$0x3]
      %v322 = vunpack.c.l.b16 %v253
      %v323 = vunpack.c.l.b16 %v254
      %v324 = vunpack.c.l.b16 %v255
      %v325 = vunpack.c.l.b16 %v256
      %v326 = vunpack.c.l.b16 %v257
      %v327 = vunpack.c.l.b16 %v258
      %v328 = vunpack.c.l.b16 %v259
      %v329 = vunpack.c.l.b16 %v260
      %v330 = vunpack.c.l.b16 %v261
      %v331 = vunpack.c.l.b16 %v262
      %v332 = vunpack.c.l.b16 %v263
      %v333 = vunpack.c.l.b16 %v264
      %v334 = vunpack.c.l.b16 %v265
      %v335 = vunpack.c.l.b16 %v266
      %v336 = vunpack.c.l.b16 %v267
      %v337 = vunpack.c.l.b16 %v268
      %v338 = vunpack.c.l.b16 %v269
      %v339 = vunpack.c.l.b16 %v270
      %v340 = vunpack.c.l.b16 %v271
      %v341 = vunpack.c.l.b16 %v272
      %v342 = vunpack.c.l.b16 %v273
      %v343 = vunpack.c.l.b16 %v274
      %v344 = vunpack.c.l.b16 %v275
      %v345 = vunpack.c.l.b16 %v276
      %v346 = vunpack.c.l.b16 %v277
      %v347 = vunpack.c.l.b16 %v278
      %v348 = vunpack.c.l.b16 %v279
      %v349 = vunpack.c.l.b16 %v280
      %v350 = vunpack.c.l.b16 %v281
      %v351 = vunpack.c.l.b16 %v282
      %v352 = vunpack.c.l.b16 %v283
      %v353 = vunpack.c.l.b16 %v284
      %v354 = vpack.c.b16 %v323, %v322
      %v355 = vpack.c.b16 %v325, %v324
      %v356 = vpack.c.b16 %v327, %v326
      %v357 = vpack.c.b16 %v329, %v328
      %v358 = vpack.c.b16 %v331, %v330
      %v359 = vpack.c.b16 %v333, %v332
      %v360 = vpack.c.b16 %v335, %v334
      %v361 = vpack.c.b16 %v337, %v336
      %v362 = vpack.c.b16 %v339, %v338
      %v363 = vpack.c.b16 %v341, %v340
      %v364 = vpack.c.b16 %v343, %v342
      %v365 = vpack.c.b16 %v345, %v344
      %v366 = vpack.c.b16 %v347, %v346
      %v367 = vpack.c.b16 %v349, %v348
      %v368 = vpack.c.b16 %v351, %v350
      %v369 = vpack.c.b16 %v353, %v352
      %v375 = vunpack.c.l.b16 %v285
      %v376 = vunpack.c.l.b16 %v286
      %v377 = vunpack.c.l.b16 %v287
      %v378 = vunpack.c.l.b16 %v288
      %v379 = vunpack.c.l.b16 %v289
      %v380 = vpack.c.b16 %v376, %v375
      %v381 = vpack.c.b16 %v378, %v377
      %v382 = vpack.c.b16 %v379, %v379
      %vm385 = vcmask 293888
      %v387 = vsel %vm385, %v354, 0
      %v390 = vsel %vm385, %v355, 0
      %v393 = vsel %vm385, %v356, 0
      %v396 = vsel %vm385, %v357, 0
      %v399 = vsel %vm385, %v358, 0
      %v402 = vsel %vm385, %v359, 0
      %v405 = vsel %vm385, %v360, 0
      %v408 = vsel %vm385, %v361, 0
      %v411 = vsel %vm385, %v362, 0
      %v414 = vsel %vm385, %v363, 0
      %v417 = vsel %vm385, %v364, 0
      %v420 = vsel %vm385, %v365, 0
      %v423 = vsel %vm385, %v366, 0
      %v426 = vsel %vm385, %v367, 0
      %v429 = vsel %vm385, %v368, 0
      %v432 = vsel %vm385, %v369, 0
      %vm434 = vcmask 1041408
      %v436 = vsel %vm434, %v382, 0
      %438 = vmatprep.subr.bf16.mxu0 0
      %439 = vmatpush1.bf16.msra.mxu0 %v380
      %440 = vmatprep.subr.bf16.mxu0 0
      %441 = vmatpush1.bf16.msra.mxu0 %v381
      %442 = vmatprep.subr.bf16.mxu0 0
      %443 = vmatpush1.bf16.msra.mxu0 %v436
      %444 = vmatprep.subr.bf16.mxu0 0
      %445 = vmatpush1.bf16.msra.mxu0 0
      %446 = vmatprep.subr.bf16.mxu0 0
      %447 = vmatpush1.bf16.msra.mxu0 0
      %448 = vmatprep.subr.bf16.mxu0 0
      %449 = vmatpush1.bf16.msra.mxu0 0
      %450 = vmatprep.subr.bf16.mxu0 0
      %451 = vmatpush1.bf16.msra.mxu0 0
      %452 = vmatprep.subr.bf16.mxu0 0
      %453 = vmatpush1.bf16.msra.mxu0 0
      %454 = vmatprep.subr.bf16.mxu0 0
      %455 = vmatpush1.bf16.msra.mxu0 0
      %456 = vmatprep.subr.bf16.mxu0 0
      %457 = vmatpush1.bf16.msra.mxu0 0
      %458 = vmatprep.subr.bf16.mxu0 0
      %459 = vmatpush1.bf16.msra.mxu0 0
      %460 = vmatprep.subr.bf16.mxu0 0
      %461 = vmatpush1.bf16.msra.mxu0 0
      %462 = vmatprep.subr.bf16.mxu0 0
      %463 = vmatpush1.bf16.msra.mxu0 0
      %464 = vmatprep.subr.bf16.mxu0 0
      %465 = vmatpush1.bf16.msra.mxu0 0
      %466 = vmatprep.subr.bf16.mxu0 0
      %467 = vmatpush1.bf16.msra.mxu0 0
      %468 = vmatprep.subr.bf16.mxu0 0
      %469 = vmatpush1.bf16.msra.mxu0 0
      %470 = vmatprep.mubr.bf16.mxu0 0
      %471 = vmatmul.mubr.bf16.gmra.mrb[0].mxu0 %v387
      %v472 = vpop.f32.mrb[0].mxu0
      %v473 = vadd.f32 0.0, %v472
      %v474 = vpop.f32.mrb[0].mxu0
      %v475 = vpop.f32.mrb[0].mxu0
      %v476 = vadd.f32 0.0, %v475
      %v477 = vpop.f32.mrb[0].mxu0
      %478 = vmatprep.mubr.bf16.mxu0 0
      %479 = vmatmul.mubr.bf16.gmra.mrb[0].mxu0 %v390
      %v480 = vpop.f32.mrb[0].mxu0
      %v481 = vadd.f32 0.0, %v480
      %v482 = vpop.f32.mrb[0].mxu0
      %v483 = vpop.f32.mrb[0].mxu0
      %v484 = vadd.f32 0.0, %v483
      %v485 = vpop.f32.mrb[0].mxu0
      %486 = vmatprep.mubr.bf16.mxu0 0
      %487 = vmatmul.mubr.bf16.gmra.mrb[0].mxu0 %v393
      %v488 = vpop.f32.mrb[0].mxu0
      %v489 = vadd.f32 0.0, %v488
      %v490 = vpop.f32.mrb[0].mxu0
      %v491 = vpop.f32.mrb[0].mxu0
      %v492 = vadd.f32 0.0, %v491
      %v493 = vpop.f32.mrb[0].mxu0
      %494 = vmatprep.mubr.bf16.mxu0 0
      %495 = vmatmul.mubr.bf16.gmra.mrb[0].mxu0 %v396
      %v496 = vpop.f32.mrb[0].mxu0
      %v497 = vadd.f32 0.0, %v496
      %v498 = vpop.f32.mrb[0].mxu0
      %v499 = vpop.f32.mrb[0].mxu0
      %v500 = vadd.f32 0.0, %v499
      %v501 = vpop.f32.mrb[0].mxu0
      %502 = vmatprep.mubr.bf16.mxu0 0
      %503 = vmatmul.mubr.bf16.gmra.mrb[0].mxu0 %v399
      %v504 = vpop.f32.mrb[0].mxu0
      %v505 = vadd.f32 0.0, %v504
      %v506 = vpop.f32.mrb[0].mxu0
      %v507 = vpop.f32.mrb[0].mxu0
      %v508 = vadd.f32 0.0, %v507
      %v509 = vpop.f32.mrb[0].mxu0
      %510 = vmatprep.mubr.bf16.mxu0 0
      %511 = vmatmul.mubr.bf16.gmra.mrb[0].mxu0 %v402
      %v512 = vpop.f32.mrb[0].mxu0
      %v513 = vadd.f32 0.0, %v512
      %v514 = vpop.f32.mrb[0].mxu0
      %v515 = vpop.f32.mrb[0].mxu0
      %v516 = vadd.f32 0.0, %v515
      %v517 = vpop.f32.mrb[0].mxu0
      %518 = vmatprep.mubr.bf16.mxu0 0
      %519 = vmatmul.mubr.bf16.gmra.mrb[0].mxu0 %v405
      %v520 = vpop.f32.mrb[0].mxu0
      %v521 = vadd.f32 0.0, %v520
      %v522 = vpop.f32.mrb[0].mxu0
      %v523 = vpop.f32.mrb[0].mxu0
      %v524 = vadd.f32 0.0, %v523
      %v525 = vpop.f32.mrb[0].mxu0
      %526 = vmatprep.mubr.bf16.mxu0 0
      %527 = vmatmul.mubr.bf16.gmra.mrb[0].mxu0 %v408
      %v528 = vpop.f32.mrb[0].mxu0
      %v529 = vadd.f32 0.0, %v528
      %v530 = vpop.f32.mrb[0].mxu0
      %v531 = vpop.f32.mrb[0].mxu0
      %v532 = vadd.f32 0.0, %v531
      %v533 = vpop.f32.mrb[0].mxu0
      %534 = vmatprep.mubr.bf16.mxu0 0
      %535 = vmatmul.mubr.bf16.gmra.mrb[0].mxu0 %v411
      %v536 = vpop.f32.mrb[0].mxu0
      %v537 = vadd.f32 0.0, %v536
      %v538 = vpop.f32.mrb[0].mxu0
      %v539 = vpop.f32.mrb[0].mxu0
      %v540 = vadd.f32 0.0, %v539
      %v541 = vpop.f32.mrb[0].mxu0
      %542 = vmatprep.mubr.bf16.mxu0 0
      %543 = vmatmul.mubr.bf16.gmra.mrb[0].mxu0 %v414
      %v544 = vpop.f32.mrb[0].mxu0
      %v545 = vadd.f32 0.0, %v544
      %v546 = vpop.f32.mrb[0].mxu0
      %v547 = vpop.f32.mrb[0].mxu0
      %v548 = vadd.f32 0.0, %v547
      %v549 = vpop.f32.mrb[0].mxu0
      %550 = vmatprep.mubr.bf16.mxu0 0
      %551 = vmatmul.mubr.bf16.gmra.mrb[0].mxu0 %v417
      %v552 = vpop.f32.mrb[0].mxu0
      %v553 = vadd.f32 0.0, %v552
      %v554 = vpop.f32.mrb[0].mxu0
      %v555 = vpop.f32.mrb[0].mxu0
      %v556 = vadd.f32 0.0, %v555
      %v557 = vpop.f32.mrb[0].mxu0
      %558 = vmatprep.mubr.bf16.mxu0 0
      %559 = vmatmul.mubr.bf16.gmra.mrb[0].mxu0 %v420
      %v560 = vpop.f32.mrb[0].mxu0
      %v561 = vadd.f32 0.0, %v560
      %v562 = vpop.f32.mrb[0].mxu0
      %v563 = vpop.f32.mrb[0].mxu0
      %v564 = vadd.f32 0.0, %v563
      %v565 = vpop.f32.mrb[0].mxu0
      %566 = vmatprep.mubr.bf16.mxu0 0
      %567 = vmatmul.mubr.bf16.gmra.mrb[0].mxu0 %v423
      %v568 = vpop.f32.mrb[0].mxu0
      %v569 = vadd.f32 0.0, %v568
      %v570 = vpop.f32.mrb[0].mxu0
      %v571 = vpop.f32.mrb[0].mxu0
      %v572 = vadd.f32 0.0, %v571
      %v573 = vpop.f32.mrb[0].mxu0
      %574 = vmatprep.mubr.bf16.mxu0 0
      %575 = vmatmul.mubr.bf16.gmra.mrb[0].mxu0 %v426
      %v576 = vpop.f32.mrb[0].mxu0
      %v577 = vadd.f32 0.0, %v576
      %v578 = vpop.f32.mrb[0].mxu0
      %v579 = vpop.f32.mrb[0].mxu0
      %v580 = vadd.f32 0.0, %v579
      %v581 = vpop.f32.mrb[0].mxu0
      %582 = vmatprep.mubr.bf16.mxu0 0
      %583 = vmatmul.mubr.bf16.gmra.mrb[0].mxu0 %v429
      %v584 = vpop.f32.mrb[0].mxu0
      %v585 = vadd.f32 0.0, %v584
      %v586 = vpop.f32.mrb[0].mxu0
      %v587 = vpop.f32.mrb[0].mxu0
      %v588 = vadd.f32 0.0, %v587
      %v589 = vpop.f32.mrb[0].mxu0
      %590 = vmatprep.mubr.bf16.mxu0 0
      %591 = vmatmul.mubr.bf16.gmra.mrb[0].mxu0 %v432
      %v592 = vpop.f32.mrb[0].mxu0
      %v593 = vadd.f32 0.0, %v592
      %v594 = vpop.f32.mrb[0].mxu0
      %v595 = vpop.f32.mrb[0].mxu0
      %v596 = vadd.f32 0.0, %v595
      %v597 = vpop.f32.mrb[0].mxu0
      %598 = vdwg.mxu0
      %v599 = vld [vmem:[%s2] sm:$0x3]
      %v600 = vlaneseq
      %v601 = vshrl.u32 %v600, 7
      %v602 = vsub.s32 0, %v601
      %v603 = vrot.slane %v599, %v602
      %v604 = vmul.f32 %v473, %v603
      %v605 = vmul.f32 %v476, %v603
      %v606 = vmul.f32 %v481, %v603
      %v607 = vmul.f32 %v484, %v603
      %v608 = vmul.f32 %v489, %v603
      %v609 = vmul.f32 %v492, %v603
      %v610 = vmul.f32 %v497, %v603
      %v611 = vmul.f32 %v500, %v603
      %v612 = vmul.f32 %v505, %v603
      %v613 = vmul.f32 %v508, %v603
      %v614 = vmul.f32 %v513, %v603
      %v615 = vmul.f32 %v516, %v603
      %v616 = vmul.f32 %v521, %v603
      %v617 = vmul.f32 %v524, %v603
      %v618 = vmul.f32 %v529, %v603
      %v619 = vmul.f32 %v532, %v603
      %v620 = vmul.f32 %v537, %v603
      %v621 = vmul.f32 %v540, %v603
      %v622 = vmul.f32 %v545, %v603
      %v623 = vmul.f32 %v548, %v603
      %v624 = vmul.f32 %v553, %v603
      %v625 = vmul.f32 %v556, %v603
      %v626 = vmul.f32 %v561, %v603
      %v627 = vmul.f32 %v564, %v603
      %v628 = vmul.f32 %v569, %v603
      %v629 = vmul.f32 %v572, %v603
      %v630 = vmul.f32 %v577, %v603
      %v631 = vmul.f32 %v580, %v603
      %v632 = vmul.f32 %v585, %v603
      %v633 = vmul.f32 %v588, %v603
      %v634 = vmul.f32 %v593, %v603
      %v635 = vmul.f32 %v596, %v603
      %v636 = vlaneseq
      %v637 = vshrl.u32 %v636, 7
      %v638 = vsub.s32 1, %v637
      %v639 = vrot.slane %v599, %v638
      %v640 = vadd.f32 %v604, %v639
      %v641 = vadd.f32 %v605, %v639
      %v642 = vadd.f32 %v606, %v639
      %v643 = vadd.f32 %v607, %v639
      %v644 = vadd.f32 %v608, %v639
      %v645 = vadd.f32 %v609, %v639
      %v646 = vadd.f32 %v610, %v639
      %v647 = vadd.f32 %v611, %v639
      %v648 = vadd.f32 %v612, %v639
      %v649 = vadd.f32 %v613, %v639
      %v650 = vadd.f32 %v614, %v639
      %v651 = vadd.f32 %v615, %v639
      %v652 = vadd.f32 %v616, %v639
      %v653 = vadd.f32 %v617, %v639
      %v654 = vadd.f32 %v618, %v639
      %v655 = vadd.f32 %v619, %v639
      %v656 = vadd.f32 %v620, %v639
      %v657 = vadd.f32 %v621, %v639
      %v658 = vadd.f32 %v622, %v639
      %v659 = vadd.f32 %v623, %v639
      %v660 = vadd.f32 %v624, %v639
      %v661 = vadd.f32 %v625, %v639
      %v662 = vadd.f32 %v626, %v639
      %v663 = vadd.f32 %v627, %v639
      %v664 = vadd.f32 %v628, %v639
      %v665 = vadd.f32 %v629, %v639
      %v666 = vadd.f32 %v630, %v639
      %v667 = vadd.f32 %v631, %v639
      %v668 = vadd.f32 %v632, %v639
      %v669 = vadd.f32 %v633, %v639
      %v670 = vadd.f32 %v634, %v639
      %v671 = vadd.f32 %v635, %v639
      %v672 = vmax.f32 %v640, 0.0
      %v673 = vmax.f32 %v641, 0.0
      %v674 = vmax.f32 %v642, 0.0
      %v675 = vmax.f32 %v643, 0.0
      %v676 = vmax.f32 %v644, 0.0
      %v677 = vmax.f32 %v645, 0.0
      %v678 = vmax.f32 %v646, 0.0
      %v679 = vmax.f32 %v647, 0.0
      %v680 = vmax.f32 %v648, 0.0
      %v681 = vmax.f32 %v649, 0.0
      %v682 = vmax.f32 %v650, 0.0
      %v683 = vmax.f32 %v651, 0.0
      %v684 = vmax.f32 %v652, 0.0
      %v685 = vmax.f32 %v653, 0.0
      %v686 = vmax.f32 %v654, 0.0
      %v687 = vmax.f32 %v655, 0.0
      %v688 = vmax.f32 %v656, 0.0
      %v689 = vmax.f32 %v657, 0.0
      %v690 = vmax.f32 %v658, 0.0
      %v691 = vmax.f32 %v659, 0.0
      %v692 = vmax.f32 %v660, 0.0
      %v693 = vmax.f32 %v661, 0.0
      %v694 = vmax.f32 %v662, 0.0
      %v695 = vmax.f32 %v663, 0.0
      %v696 = vmax.f32 %v664, 0.0
      %v697 = vmax.f32 %v665, 0.0
      %v698 = vmax.f32 %v666, 0.0
      %v699 = vmax.f32 %v667, 0.0
      %v700 = vmax.f32 %v668, 0.0
      %v701 = vmax.f32 %v669, 0.0
      %v702 = vmax.f32 %v670, 0.0
      %v703 = vmax.f32 %v671, 0.0
      %v704 = vpack.c.bf16 %v673, %v672
      %v705 = vpack.c.bf16 %v675, %v674
      %v706 = vpack.c.bf16 %v677, %v676
      %v707 = vpack.c.bf16 %v679, %v678
      %v708 = vpack.c.bf16 %v681, %v680
      %v709 = vpack.c.bf16 %v683, %v682
      %v710 = vpack.c.bf16 %v685, %v684
      %v711 = vpack.c.bf16 %v687, %v686
      %v712 = vpack.c.bf16 %v689, %v688
      %v713 = vpack.c.bf16 %v691, %v690
      %v714 = vpack.c.bf16 %v693, %v692
      %v715 = vpack.c.bf16 %v695, %v694
      %v716 = vpack.c.bf16 %v697, %v696
      %v717 = vpack.c.bf16 %v699, %v698
      %v718 = vpack.c.bf16 %v701, %v700
      %v719 = vpack.c.bf16 %v703, %v702
      %v720 = vld [vmem:[%s3] sm:$0xf]
      %v721 = vld [vmem:[%s4] sm:$0x1]
      %v723 = vlaneseq
      %v724 = vshrl.u32 %v723, 7
      %v725 = vsub.s32 0, %v724
      %v726 = vrot.slane %v721, %v725
      %vm728 = vcmask 64512
      %v730 = vsel %vm728, %v704, 0
      %v733 = vsel %vm728, %v705, 0
      %v736 = vsel %vm728, %v706, 0
      %v739 = vsel %vm728, %v707, 0
      %v742 = vsel %vm728, %v708, 0
      %v745 = vsel %vm728, %v709, 0
      %v748 = vsel %vm728, %v710, 0
      %v751 = vsel %vm728, %v711, 0
      %v754 = vsel %vm728, %v712, 0
      %v757 = vsel %vm728, %v713, 0
      %v760 = vsel %vm728, %v714, 0
      %v763 = vsel %vm728, %v715, 0
      %v766 = vsel %vm728, %v716, 0
      %v769 = vsel %vm728, %v717, 0
      %v772 = vsel %vm728, %v718, 0
      %v775 = vsel %vm728, %v719, 0
      %vm777 = vcmask 1043456
      %v779 = vsel %vm777, %v720, 0
      %781 = vmatprep.subr.bf16.mxu0 0
      %782 = vmatpush1.bf16.msra.mxu0 %v779
      %783 = vmatprep.subr.bf16.mxu0 0
      %784 = vmatpush1.bf16.msra.mxu0 0
      %785 = vmatprep.subr.bf16.mxu0 0
      %786 = vmatpush1.bf16.msra.mxu0 0
      %787 = vmatprep.subr.bf16.mxu0 0
      %788 = vmatpush1.bf16.msra.mxu0 0
      %789 = vmatprep.subr.bf16.mxu0 0
      %790 = vmatpush1.bf16.msra.mxu0 0
      %791 = vmatprep.subr.bf16.mxu0 0
      %792 = vmatpush1.bf16.msra.mxu0 0
      %793 = vmatprep.subr.bf16.mxu0 0
      %794 = vmatpush1.bf16.msra.mxu0 0
      %795 = vmatprep.subr.bf16.mxu0 0
      %796 = vmatpush1.bf16.msra.mxu0 0
      %797 = vmatprep.subr.bf16.mxu0 0
      %798 = vmatpush1.bf16.msra.mxu0 0
      %799 = vmatprep.subr.bf16.mxu0 0
      %800 = vmatpush1.bf16.msra.mxu0 0
      %801 = vmatprep.subr.bf16.mxu0 0
      %802 = vmatpush1.bf16.msra.mxu0 0
      %803 = vmatprep.subr.bf16.mxu0 0
      %804 = vmatpush1.bf16.msra.mxu0 0
      %805 = vmatprep.subr.bf16.mxu0 0
      %806 = vmatpush1.bf16.msra.mxu0 0
      %807 = vmatprep.subr.bf16.mxu0 0
      %808 = vmatpush1.bf16.msra.mxu0 0
      %809 = vmatprep.subr.bf16.mxu0 0
      %810 = vmatpush1.bf16.msra.mxu0 0
      %811 = vmatprep.subr.bf16.mxu0 0
      %812 = vmatpush1.bf16.msra.mxu0 0
      %813 = vmatprep.mubr.bf16.mxu0 0
      %814 = vmatmul.mubr.bf16.gmra.mrb[0].mxu0 %v730
      %v815 = vpop.f32.mrb[0].mxu0
      %v816 = vadd.f32 %v726, %v815
      %v817 = vpop.f32.mrb[0].mxu0
      %v818 = vpop.f32.mrb[0].mxu0
      %v819 = vadd.f32 %v726, %v818
      %v820 = vpop.f32.mrb[0].mxu0
      %821 = vmatprep.mubr.bf16.mxu0 0
      %822 = vmatmul.mubr.bf16.gmra.mrb[0].mxu0 %v733
      %v823 = vpop.f32.mrb[0].mxu0
      %v824 = vadd.f32 %v726, %v823
      %v825 = vpop.f32.mrb[0].mxu0
      %v826 = vpop.f32.mrb[0].mxu0
      %v827 = vadd.f32 %v726, %v826
      %v828 = vpop.f32.mrb[0].mxu0
      %829 = vmatprep.mubr.bf16.mxu0 0
      %830 = vmatmul.mubr.bf16.gmra.mrb[0].mxu0 %v736
      %v831 = vpop.f32.mrb[0].mxu0
      %v832 = vadd.f32 %v726, %v831
      %v833 = vpop.f32.mrb[0].mxu0
      %v834 = vpop.f32.mrb[0].mxu0
      %v835 = vadd.f32 %v726, %v834
      %v836 = vpop.f32.mrb[0].mxu0
      %837 = vmatprep.mubr.bf16.mxu0 0
      %838 = vmatmul.mubr.bf16.gmra.mrb[0].mxu0 %v739
      %v839 = vpop.f32.mrb[0].mxu0
      %v840 = vadd.f32 %v726, %v839
      %v841 = vpop.f32.mrb[0].mxu0
      %v842 = vpop.f32.mrb[0].mxu0
      %v843 = vadd.f32 %v726, %v842
      %v844 = vpop.f32.mrb[0].mxu0
      %845 = vmatprep.mubr.bf16.mxu0 0
      %846 = vmatmul.mubr.bf16.gmra.mrb[0].mxu0 %v742
      %v847 = vpop.f32.mrb[0].mxu0
      %v848 = vadd.f32 %v726, %v847
      %v849 = vpop.f32.mrb[0].mxu0
      %v850 = vpop.f32.mrb[0].mxu0
      %v851 = vadd.f32 %v726, %v850
      %v852 = vpop.f32.mrb[0].mxu0
      %853 = vmatprep.mubr.bf16.mxu0 0
      %854 = vmatmul.mubr.bf16.gmra.mrb[0].mxu0 %v745
      %v855 = vpop.f32.mrb[0].mxu0
      %v856 = vadd.f32 %v726, %v855
      %v857 = vpop.f32.mrb[0].mxu0
      %v858 = vpop.f32.mrb[0].mxu0
      %v859 = vadd.f32 %v726, %v858
      %v860 = vpop.f32.mrb[0].mxu0
      %861 = vmatprep.mubr.bf16.mxu0 0
      %862 = vmatmul.mubr.bf16.gmra.mrb[0].mxu0 %v748
      %v863 = vpop.f32.mrb[0].mxu0
      %v864 = vadd.f32 %v726, %v863
      %v865 = vpop.f32.mrb[0].mxu0
      %v866 = vpop.f32.mrb[0].mxu0
      %v867 = vadd.f32 %v726, %v866
      %v868 = vpop.f32.mrb[0].mxu0
      %869 = vmatprep.mubr.bf16.mxu0 0
      %870 = vmatmul.mubr.bf16.gmra.mrb[0].mxu0 %v751
      %v871 = vpop.f32.mrb[0].mxu0
      %v872 = vadd.f32 %v726, %v871
      %v873 = vpop.f32.mrb[0].mxu0
      %v874 = vpop.f32.mrb[0].mxu0
      %v875 = vadd.f32 %v726, %v874
      %v876 = vpop.f32.mrb[0].mxu0
      %877 = vmatprep.mubr.bf16.mxu0 0
      %878 = vmatmul.mubr.bf16.gmra.mrb[0].mxu0 %v754
      %v879 = vpop.f32.mrb[0].mxu0
      %v880 = vadd.f32 %v726, %v879
      %v881 = vpop.f32.mrb[0].mxu0
      %v882 = vpop.f32.mrb[0].mxu0
      %v883 = vadd.f32 %v726, %v882
      %v884 = vpop.f32.mrb[0].mxu0
      %885 = vmatprep.mubr.bf16.mxu0 0
      %886 = vmatmul.mubr.bf16.gmra.mrb[0].mxu0 %v757
      %v887 = vpop.f32.mrb[0].mxu0
      %v888 = vadd.f32 %v726, %v887
      %v889 = vpop.f32.mrb[0].mxu0
      %v890 = vpop.f32.mrb[0].mxu0
      %v891 = vadd.f32 %v726, %v890
      %v892 = vpop.f32.mrb[0].mxu0
      %893 = vmatprep.mubr.bf16.mxu0 0
      %894 = vmatmul.mubr.bf16.gmra.mrb[0].mxu0 %v760
      %v895 = vpop.f32.mrb[0].mxu0
      %v896 = vadd.f32 %v726, %v895
      %v897 = vpop.f32.mrb[0].mxu0
      %v898 = vpop.f32.mrb[0].mxu0
      %v899 = vadd.f32 %v726, %v898
      %v900 = vpop.f32.mrb[0].mxu0
      %901 = vmatprep.mubr.bf16.mxu0 0
      %902 = vmatmul.mubr.bf16.gmra.mrb[0].mxu0 %v763
      %v903 = vpop.f32.mrb[0].mxu0
      %v904 = vadd.f32 %v726, %v903
      %v905 = vpop.f32.mrb[0].mxu0
      %v906 = vpop.f32.mrb[0].mxu0
      %v907 = vadd.f32 %v726, %v906
      %v908 = vpop.f32.mrb[0].mxu0
      %909 = vmatprep.mubr.bf16.mxu0 0
      %910 = vmatmul.mubr.bf16.gmra.mrb[0].mxu0 %v766
      %v911 = vpop.f32.mrb[0].mxu0
      %v912 = vadd.f32 %v726, %v911
      %v913 = vpop.f32.mrb[0].mxu0
      %v914 = vpop.f32.mrb[0].mxu0
      %v915 = vadd.f32 %v726, %v914
      %v916 = vpop.f32.mrb[0].mxu0
      %917 = vmatprep.mubr.bf16.mxu0 0
      %918 = vmatmul.mubr.bf16.gmra.mrb[0].mxu0 %v769
      %v919 = vpop.f32.mrb[0].mxu0
      %v920 = vadd.f32 %v726, %v919
      %v921 = vpop.f32.mrb[0].mxu0
      %v922 = vpop.f32.mrb[0].mxu0
      %v923 = vadd.f32 %v726, %v922
      %v924 = vpop.f32.mrb[0].mxu0
      %925 = vmatprep.mubr.bf16.mxu0 0
      %926 = vmatmul.mubr.bf16.gmra.mrb[0].mxu0 %v772
      %v927 = vpop.f32.mrb[0].mxu0
      %v928 = vadd.f32 %v726, %v927
      %v929 = vpop.f32.mrb[0].mxu0
      %v930 = vpop.f32.mrb[0].mxu0
      %v931 = vadd.f32 %v726, %v930
      %v932 = vpop.f32.mrb[0].mxu0
      %933 = vmatprep.mubr.bf16.mxu0 0
      %934 = vmatmul.mubr.bf16.gmra.mrb[0].mxu0 %v775
      %v935 = vpop.f32.mrb[0].mxu0
      %v936 = vadd.f32 %v726, %v935
      %v937 = vpop.f32.mrb[0].mxu0
      %v938 = vpop.f32.mrb[0].mxu0
      %v939 = vadd.f32 %v726, %v938
      %v940 = vpop.f32.mrb[0].mxu0
      %941 = vdwg.mxu0
      %v942 = vld [vmem:[%s5] sm:$0xff]
      %v943 = vld [vmem:[%s5 + $0x8] sm:$0xff]
      %v944 = vld [vmem:[%s5 + $0x10] sm:$0xff]
      %v945 = vld [vmem:[%s5 + $0x18] sm:$0xff]
      %v946 = vld [vmem:[%s5 + $0x20] sm:$0xff]
      %v947 = vld [vmem:[%s5 + $0x28] sm:$0xff]
      %v948 = vld [vmem:[%s5 + $0x30] sm:$0xff]
      %v949 = vld [vmem:[%s5 + $0x38] sm:$0xff]
      %v950 = vld [vmem:[%s5 + $0x40] sm:$0xff]
      %v951 = vld [vmem:[%s5 + $0x48] sm:$0xff]
      %v952 = vld [vmem:[%s5 + $0x50] sm:$0xff]
      %v953 = vld [vmem:[%s5 + $0x58] sm:$0xff]
      %v954 = vld [vmem:[%s5 + $0x60] sm:$0xff]
      %v955 = vld [vmem:[%s5 + $0x68] sm:$0xff]
      %v956 = vld [vmem:[%s5 + $0x70] sm:$0xff]
      %v957 = vld [vmem:[%s5 + $0x78] sm:$0xff]
      %v958 = vld [vmem:[%s5 + $0x80] sm:$0xff]
      %v959 = vld [vmem:[%s5 + $0x88] sm:$0xff]
      %v960 = vld [vmem:[%s5 + $0x90] sm:$0xff]
      %v961 = vld [vmem:[%s5 + $0x98] sm:$0xff]
      %v962 = vld [vmem:[%s5 + $0xa0] sm:$0xff]
      %v963 = vld [vmem:[%s5 + $0xa8] sm:$0xff]
      %v964 = vld [vmem:[%s5 + $0xb0] sm:$0xff]
      %v965 = vld [vmem:[%s5 + $0xb8] sm:$0xff]
      %v966 = vld [vmem:[%s5 + $0xc0] sm:$0xff]
      %v967 = vld [vmem:[%s5 + $0xc8] sm:$0xff]
      %v968 = vld [vmem:[%s5 + $0xd0] sm:$0xff]
      %v969 = vld [vmem:[%s5 + $0xd8] sm:$0xff]
      %v970 = vld [vmem:[%s5 + $0xe0] sm:$0xff]
      %v971 = vld [vmem:[%s5 + $0xe8] sm:$0xff]
      %v972 = vld [vmem:[%s5 + $0xf0] sm:$0xff]
      %v973 = vld [vmem:[%s5 + $0xf8] sm:$0xff]
      %vm1006 = vcmask 1040384
      %v1007 = vrot.slane %v816, 7
      %v1008 = vrot.slane %v819, 7
      %v1009 = vsel %vm1006, %v1007, %v1008
      %v1010 = vrot.slane %v824, 7
      %v1011 = vsel %vm1006, %v1008, %v1010
      %v1012 = vrot.slane %v827, 7
      %v1013 = vsel %vm1006, %v1010, %v1012
      %v1014 = vrot.slane %v832, 7
      %v1015 = vsel %vm1006, %v1012, %v1014
      %v1016 = vrot.slane %v835, 7
      %v1017 = vsel %vm1006, %v1014, %v1016
      %v1018 = vrot.slane %v840, 7
      %v1019 = vsel %vm1006, %v1016, %v1018
      %v1020 = vrot.slane %v843, 7
      %v1021 = vsel %vm1006, %v1018, %v1020
      %v1022 = vrot.slane %v848, 7
      %v1023 = vsel %vm1006, %v1020, %v1022
      %v1024 = vrot.slane %v851, 7
      %v1025 = vsel %vm1006, %v1022, %v1024
      %v1026 = vrot.slane %v856, 7
      %v1027 = vsel %vm1006, %v1024, %v1026
      %v1028 = vrot.slane %v859, 7
      %v1029 = vsel %vm1006, %v1026, %v1028
      %v1030 = vrot.slane %v864, 7
      %v1031 = vsel %vm1006, %v1028, %v1030
      %v1032 = vrot.slane %v867, 7
      %v1033 = vsel %vm1006, %v1030, %v1032
      %v1034 = vrot.slane %v872, 7
      %v1035 = vsel %vm1006, %v1032, %v1034
      %v1036 = vrot.slane %v875, 7
      %v1037 = vsel %vm1006, %v1034, %v1036
      %v1038 = vrot.slane %v880, 7
      %v1039 = vsel %vm1006, %v1036, %v1038
      %v1040 = vrot.slane %v883, 7
      %v1041 = vsel %vm1006, %v1038, %v1040
      %v1042 = vrot.slane %v888, 7
      %v1043 = vsel %vm1006, %v1040, %v1042
      %v1044 = vrot.slane %v891, 7
      %v1045 = vsel %vm1006, %v1042, %v1044
      %v1046 = vrot.slane %v896, 7
      %v1047 = vsel %vm1006, %v1044, %v1046
      %v1048 = vrot.slane %v899, 7
      %v1049 = vsel %vm1006, %v1046, %v1048
      %v1050 = vrot.slane %v904, 7
      %v1051 = vsel %vm1006, %v1048, %v1050
      %v1052 = vrot.slane %v907, 7
      %v1053 = vsel %vm1006, %v1050, %v1052
      %v1054 = vrot.slane %v912, 7
      %v1055 = vsel %vm1006, %v1052, %v1054
      %v1056 = vrot.slane %v915, 7
      %v1057 = vsel %vm1006, %v1054, %v1056
      %v1058 = vrot.slane %v920, 7
      %v1059 = vsel %vm1006, %v1056, %v1058
      %v1060 = vrot.slane %v923, 7
      %v1061 = vsel %vm1006, %v1058, %v1060
      %v1062 = vrot.slane %v928, 7
      %v1063 = vsel %vm1006, %v1060, %v1062
      %v1064 = vrot.slane %v931, 7
      %v1065 = vsel %vm1006, %v1062, %v1064
      %v1066 = vrot.slane %v936, 7
      %v1067 = vsel %vm1006, %v1064, %v1066
      %v1068 = vrot.slane %v939, 7
      %v1069 = vsel %vm1006, %v1066, %v1068
      %v1102 = vsel %vm1006, 0.0, %v1007
      %1104 = vset.pattern.permute.xlu0 0
      %1105 = vperm.xlu0 %1104, %v942
      %v1106 = vpop.permute.xlu0 %1105
      %1109 = vset.pattern.permute.xlu0 0
      %1110 = vperm.xlu0 %1109, %v943
      %v1111 = vpop.permute.xlu0 %1110
      %1114 = vset.pattern.permute.xlu0 0
      %1115 = vperm.xlu0 %1114, %v944
      %v1116 = vpop.permute.xlu0 %1115
      %1119 = vset.pattern.permute.xlu0 0
      %1120 = vperm.xlu0 %1119, %v945
      %v1121 = vpop.permute.xlu0 %1120
      %1124 = vset.pattern.permute.xlu0 0
      %1125 = vperm.xlu0 %1124, %v946
      %v1126 = vpop.permute.xlu0 %1125
      %1129 = vset.pattern.permute.xlu0 0
      %1130 = vperm.xlu0 %1129, %v947
      %v1131 = vpop.permute.xlu0 %1130
      %1134 = vset.pattern.permute.xlu0 0
      %1135 = vperm.xlu0 %1134, %v948
      %v1136 = vpop.permute.xlu0 %1135
      %1139 = vset.pattern.permute.xlu0 0
      %1140 = vperm.xlu0 %1139, %v949
      %v1141 = vpop.permute.xlu0 %1140
      %1144 = vset.pattern.permute.xlu0 0
      %1145 = vperm.xlu0 %1144, %v950
      %v1146 = vpop.permute.xlu0 %1145
      %1149 = vset.pattern.permute.xlu0 0
      %1150 = vperm.xlu0 %1149, %v951
      %v1151 = vpop.permute.xlu0 %1150
      %1154 = vset.pattern.permute.xlu0 0
      %1155 = vperm.xlu0 %1154, %v952
      %v1156 = vpop.permute.xlu0 %1155
      %1159 = vset.pattern.permute.xlu0 0
      %1160 = vperm.xlu0 %1159, %v953
      %v1161 = vpop.permute.xlu0 %1160
      %1164 = vset.pattern.permute.xlu0 0
      %1165 = vperm.xlu0 %1164, %v954
      %v1166 = vpop.permute.xlu0 %1165
      %1169 = vset.pattern.permute.xlu0 0
      %1170 = vperm.xlu0 %1169, %v955
      %v1171 = vpop.permute.xlu0 %1170
      %1174 = vset.pattern.permute.xlu0 0
      %1175 = vperm.xlu0 %1174, %v956
      %v1176 = vpop.permute.xlu0 %1175
      %1179 = vset.pattern.permute.xlu0 0
      %1180 = vperm.xlu0 %1179, %v957
      %v1181 = vpop.permute.xlu0 %1180
      %1184 = vset.pattern.permute.xlu0 0
      %1185 = vperm.xlu0 %1184, %v958
      %v1186 = vpop.permute.xlu0 %1185
      %1189 = vset.pattern.permute.xlu0 0
      %1190 = vperm.xlu0 %1189, %v959
      %v1191 = vpop.permute.xlu0 %1190
      %1194 = vset.pattern.permute.xlu0 0
      %1195 = vperm.xlu0 %1194, %v960
      %v1196 = vpop.permute.xlu0 %1195
      %1199 = vset.pattern.permute.xlu0 0
      %1200 = vperm.xlu0 %1199, %v961
      %v1201 = vpop.permute.xlu0 %1200
      %1204 = vset.pattern.permute.xlu0 0
      %1205 = vperm.xlu0 %1204, %v962
      %v1206 = vpop.permute.xlu0 %1205
      %1209 = vset.pattern.permute.xlu0 0
      %1210 = vperm.xlu0 %1209, %v963
      %v1211 = vpop.permute.xlu0 %1210
      %1214 = vset.pattern.permute.xlu0 0
      %1215 = vperm.xlu0 %1214, %v964
      %v1216 = vpop.permute.xlu0 %1215
      %1219 = vset.pattern.permute.xlu0 0
      %1220 = vperm.xlu0 %1219, %v965
      %v1221 = vpop.permute.xlu0 %1220
      %1224 = vset.pattern.permute.xlu0 0
      %1225 = vperm.xlu0 %1224, %v966
      %v1226 = vpop.permute.xlu0 %1225
      %1229 = vset.pattern.permute.xlu0 0
      %1230 = vperm.xlu0 %1229, %v967
      %v1231 = vpop.permute.xlu0 %1230
      %1234 = vset.pattern.permute.xlu0 0
      %1235 = vperm.xlu0 %1234, %v968
      %v1236 = vpop.permute.xlu0 %1235
      %1239 = vset.pattern.permute.xlu0 0
      %1240 = vperm.xlu0 %1239, %v969
      %v1241 = vpop.permute.xlu0 %1240
      %1244 = vset.pattern.permute.xlu0 0
      %1245 = vperm.xlu0 %1244, %v970
      %v1246 = vpop.permute.xlu0 %1245
      %1249 = vset.pattern.permute.xlu0 0
      %1250 = vperm.xlu0 %1249, %v971
      %v1251 = vpop.permute.xlu0 %1250
      %1254 = vset.pattern.permute.xlu0 0
      %1255 = vperm.xlu0 %1254, %v972
      %v1256 = vpop.permute.xlu0 %1255
      %1259 = vset.pattern.permute.xlu0 0
      %1260 = vperm.xlu0 %1259, %v973
      %v1261 = vpop.permute.xlu0 %1260
      %v1263 = vmul.f32 %v1106, %v1102
      %v1264 = vmul.f32 %v1111, %v1009
      %v1265 = vmul.f32 %v1116, %v1011
      %v1266 = vmul.f32 %v1121, %v1013
      %v1267 = vmul.f32 %v1126, %v1015
      %v1268 = vmul.f32 %v1131, %v1017
      %v1269 = vmul.f32 %v1136, %v1019
      %v1270 = vmul.f32 %v1141, %v1021
      %v1271 = vmul.f32 %v1146, %v1023
      %v1272 = vmul.f32 %v1151, %v1025
      %v1273 = vmul.f32 %v1156, %v1027
      %v1274 = vmul.f32 %v1161, %v1029
      %v1275 = vmul.f32 %v1166, %v1031
      %v1276 = vmul.f32 %v1171, %v1033
      %v1277 = vmul.f32 %v1176, %v1035
      %v1278 = vmul.f32 %v1181, %v1037
      %v1279 = vmul.f32 %v1186, %v1039
      %v1280 = vmul.f32 %v1191, %v1041
      %v1281 = vmul.f32 %v1196, %v1043
      %v1282 = vmul.f32 %v1201, %v1045
      %v1283 = vmul.f32 %v1206, %v1047
      %v1284 = vmul.f32 %v1211, %v1049
      %v1285 = vmul.f32 %v1216, %v1051
      %v1286 = vmul.f32 %v1221, %v1053
      %v1287 = vmul.f32 %v1226, %v1055
      %v1288 = vmul.f32 %v1231, %v1057
      %v1289 = vmul.f32 %v1236, %v1059
      %v1290 = vmul.f32 %v1241, %v1061
      %v1291 = vmul.f32 %v1246, %v1063
      %v1292 = vmul.f32 %v1251, %v1065
      %v1293 = vmul.f32 %v1256, %v1067
      %v1294 = vmul.f32 %v1261, %v1069
      %1295 = vset.pattern.permute.xlu0 1
      %1296 = vperm.xlu0 %1295, %v942
      %v1297 = vpop.permute.xlu0 %1296
      %1299 = vset.pattern.permute.xlu0 1
      %1300 = vperm.xlu0 %1299, %v943
      %v1301 = vpop.permute.xlu0 %1300
      %1303 = vset.pattern.permute.xlu0 1
      %1304 = vperm.xlu0 %1303, %v944
      %v1305 = vpop.permute.xlu0 %1304
      %1307 = vset.pattern.permute.xlu0 1
      %1308 = vperm.xlu0 %1307, %v945
      %v1309 = vpop.permute.xlu0 %1308
      %1311 = vset.pattern.permute.xlu0 1
      %1312 = vperm.xlu0 %1311, %v946
      %v1313 = vpop.permute.xlu0 %1312
      %1315 = vset.pattern.permute.xlu0 1
      %1316 = vperm.xlu0 %1315, %v947
      %v1317 = vpop.permute.xlu0 %1316
      %1319 = vset.pattern.permute.xlu0 1
      %1320 = vperm.xlu0 %1319, %v948
      %v1321 = vpop.permute.xlu0 %1320
      %1323 = vset.pattern.permute.xlu0 1
      %1324 = vperm.xlu0 %1323, %v949
      %v1325 = vpop.permute.xlu0 %1324
      %1327 = vset.pattern.permute.xlu0 1
      %1328 = vperm.xlu0 %1327, %v950
      %v1329 = vpop.permute.xlu0 %1328
      %1331 = vset.pattern.permute.xlu0 1
      %1332 = vperm.xlu0 %1331, %v951
      %v1333 = vpop.permute.xlu0 %1332
      %1335 = vset.pattern.permute.xlu0 1
      %1336 = vperm.xlu0 %1335, %v952
      %v1337 = vpop.permute.xlu0 %1336
      %1339 = vset.pattern.permute.xlu0 1
      %1340 = vperm.xlu0 %1339, %v953
      %v1341 = vpop.permute.xlu0 %1340
      %1343 = vset.pattern.permute.xlu0 1
      %1344 = vperm.xlu0 %1343, %v954
      %v1345 = vpop.permute.xlu0 %1344
      %1347 = vset.pattern.permute.xlu0 1
      %1348 = vperm.xlu0 %1347, %v955
      %v1349 = vpop.permute.xlu0 %1348
      %1351 = vset.pattern.permute.xlu0 1
      %1352 = vperm.xlu0 %1351, %v956
      %v1353 = vpop.permute.xlu0 %1352
      %1355 = vset.pattern.permute.xlu0 1
      %1356 = vperm.xlu0 %1355, %v957
      %v1357 = vpop.permute.xlu0 %1356
      %1359 = vset.pattern.permute.xlu0 1
      %1360 = vperm.xlu0 %1359, %v958
      %v1361 = vpop.permute.xlu0 %1360
      %1363 = vset.pattern.permute.xlu0 1
      %1364 = vperm.xlu0 %1363, %v959
      %v1365 = vpop.permute.xlu0 %1364
      %1367 = vset.pattern.permute.xlu0 1
      %1368 = vperm.xlu0 %1367, %v960
      %v1369 = vpop.permute.xlu0 %1368
      %1371 = vset.pattern.permute.xlu0 1
      %1372 = vperm.xlu0 %1371, %v961
      %v1373 = vpop.permute.xlu0 %1372
      %1375 = vset.pattern.permute.xlu0 1
      %1376 = vperm.xlu0 %1375, %v962
      %v1377 = vpop.permute.xlu0 %1376
      %1379 = vset.pattern.permute.xlu0 1
      %1380 = vperm.xlu0 %1379, %v963
      %v1381 = vpop.permute.xlu0 %1380
      %1383 = vset.pattern.permute.xlu0 1
      %1384 = vperm.xlu0 %1383, %v964
      %v1385 = vpop.permute.xlu0 %1384
      %1387 = vset.pattern.permute.xlu0 1
      %1388 = vperm.xlu0 %1387, %v965
      %v1389 = vpop.permute.xlu0 %1388
      %1391 = vset.pattern.permute.xlu0 1
      %1392 = vperm.xlu0 %1391, %v966
      %v1393 = vpop.permute.xlu0 %1392
      %1395 = vset.pattern.permute.xlu0 1
      %1396 = vperm.xlu0 %1395, %v967
      %v1397 = vpop.permute.xlu0 %1396
      %1399 = vset.pattern.permute.xlu0 1
      %1400 = vperm.xlu0 %1399, %v968
      %v1401 = vpop.permute.xlu0 %1400
      %1403 = vset.pattern.permute.xlu0 1
      %1404 = vperm.xlu0 %1403, %v969
      %v1405 = vpop.permute.xlu0 %1404
      %1407 = vset.pattern.permute.xlu0 1
      %1408 = vperm.xlu0 %1407, %v970
      %v1409 = vpop.permute.xlu0 %1408
      %1411 = vset.pattern.permute.xlu0 1
      %1412 = vperm.xlu0 %1411, %v971
      %v1413 = vpop.permute.xlu0 %1412
      %1415 = vset.pattern.permute.xlu0 1
      %1416 = vperm.xlu0 %1415, %v972
      %v1417 = vpop.permute.xlu0 %1416
      %1419 = vset.pattern.permute.xlu0 1
      %1420 = vperm.xlu0 %1419, %v973
      %v1421 = vpop.permute.xlu0 %1420
      %v1423 = vmul.f32 %v1297, %v816
      %v1424 = vmul.f32 %v1301, %v819
      %v1425 = vmul.f32 %v1305, %v824
      %v1426 = vmul.f32 %v1309, %v827
      %v1427 = vmul.f32 %v1313, %v832
      %v1428 = vmul.f32 %v1317, %v835
      %v1429 = vmul.f32 %v1321, %v840
      %v1430 = vmul.f32 %v1325, %v843
      %v1431 = vmul.f32 %v1329, %v848
      %v1432 = vmul.f32 %v1333, %v851
      %v1433 = vmul.f32 %v1337, %v856
      %v1434 = vmul.f32 %v1341, %v859
      %v1435 = vmul.f32 %v1345, %v864
      %v1436 = vmul.f32 %v1349, %v867
      %v1437 = vmul.f32 %v1353, %v872
      %v1438 = vmul.f32 %v1357, %v875
      %v1439 = vmul.f32 %v1361, %v880
      %v1440 = vmul.f32 %v1365, %v883
      %v1441 = vmul.f32 %v1369, %v888
      %v1442 = vmul.f32 %v1373, %v891
      %v1443 = vmul.f32 %v1377, %v896
      %v1444 = vmul.f32 %v1381, %v899
      %v1445 = vmul.f32 %v1385, %v904
      %v1446 = vmul.f32 %v1389, %v907
      %v1447 = vmul.f32 %v1393, %v912
      %v1448 = vmul.f32 %v1397, %v915
      %v1449 = vmul.f32 %v1401, %v920
      %v1450 = vmul.f32 %v1405, %v923
      %v1451 = vmul.f32 %v1409, %v928
      %v1452 = vmul.f32 %v1413, %v931
      %v1453 = vmul.f32 %v1417, %v936
      %v1454 = vmul.f32 %v1421, %v939
      %v1455 = vadd.f32 %v1263, %v1423
      %v1456 = vadd.f32 %v1264, %v1424
      %v1457 = vadd.f32 %v1265, %v1425
      %v1458 = vadd.f32 %v1266, %v1426
      %v1459 = vadd.f32 %v1267, %v1427
      %v1460 = vadd.f32 %v1268, %v1428
      %v1461 = vadd.f32 %v1269, %v1429
      %v1462 = vadd.f32 %v1270, %v1430
      %v1463 = vadd.f32 %v1271, %v1431
      %v1464 = vadd.f32 %v1272, %v1432
      %v1465 = vadd.f32 %v1273, %v1433
      %v1466 = vadd.f32 %v1274, %v1434
      %v1467 = vadd.f32 %v1275, %v1435
      %v1468 = vadd.f32 %v1276, %v1436
      %v1469 = vadd.f32 %v1277, %v1437
      %v1470 = vadd.f32 %v1278, %v1438
      %v1471 = vadd.f32 %v1279, %v1439
      %v1472 = vadd.f32 %v1280, %v1440
      %v1473 = vadd.f32 %v1281, %v1441
      %v1474 = vadd.f32 %v1282, %v1442
      %v1475 = vadd.f32 %v1283, %v1443
      %v1476 = vadd.f32 %v1284, %v1444
      %v1477 = vadd.f32 %v1285, %v1445
      %v1478 = vadd.f32 %v1286, %v1446
      %v1479 = vadd.f32 %v1287, %v1447
      %v1480 = vadd.f32 %v1288, %v1448
      %v1481 = vadd.f32 %v1289, %v1449
      %v1482 = vadd.f32 %v1290, %v1450
      %v1483 = vadd.f32 %v1291, %v1451
      %v1484 = vadd.f32 %v1292, %v1452
      %v1485 = vadd.f32 %v1293, %v1453
      %v1486 = vadd.f32 %v1294, %v1454
      %1487 = vset.pattern.permute.xlu0 2
      %1488 = vperm.xlu0 %1487, %v942
      %v1489 = vpop.permute.xlu0 %1488
      %1491 = vset.pattern.permute.xlu0 2
      %1492 = vperm.xlu0 %1491, %v943
      %v1493 = vpop.permute.xlu0 %1492
      %1495 = vset.pattern.permute.xlu0 2
      %1496 = vperm.xlu0 %1495, %v944
      %v1497 = vpop.permute.xlu0 %1496
      %1499 = vset.pattern.permute.xlu0 2
      %1500 = vperm.xlu0 %1499, %v945
      %v1501 = vpop.permute.xlu0 %1500
      %1503 = vset.pattern.permute.xlu0 2
      %1504 = vperm.xlu0 %1503, %v946
      %v1505 = vpop.permute.xlu0 %1504
      %1507 = vset.pattern.permute.xlu0 2
      %1508 = vperm.xlu0 %1507, %v947
      %v1509 = vpop.permute.xlu0 %1508
      %1511 = vset.pattern.permute.xlu0 2
      %1512 = vperm.xlu0 %1511, %v948
      %v1513 = vpop.permute.xlu0 %1512
      %1515 = vset.pattern.permute.xlu0 2
      %1516 = vperm.xlu0 %1515, %v949
      %v1517 = vpop.permute.xlu0 %1516
      %1519 = vset.pattern.permute.xlu0 2
      %1520 = vperm.xlu0 %1519, %v950
      %v1521 = vpop.permute.xlu0 %1520
      %1523 = vset.pattern.permute.xlu0 2
      %1524 = vperm.xlu0 %1523, %v951
      %v1525 = vpop.permute.xlu0 %1524
      %1527 = vset.pattern.permute.xlu0 2
      %1528 = vperm.xlu0 %1527, %v952
      %v1529 = vpop.permute.xlu0 %1528
      %1531 = vset.pattern.permute.xlu0 2
      %1532 = vperm.xlu0 %1531, %v953
      %v1533 = vpop.permute.xlu0 %1532
      %1535 = vset.pattern.permute.xlu0 2
      %1536 = vperm.xlu0 %1535, %v954
      %v1537 = vpop.permute.xlu0 %1536
      %1539 = vset.pattern.permute.xlu0 2
      %1540 = vperm.xlu0 %1539, %v955
      %v1541 = vpop.permute.xlu0 %1540
      %1543 = vset.pattern.permute.xlu0 2
      %1544 = vperm.xlu0 %1543, %v956
      %v1545 = vpop.permute.xlu0 %1544
      %1547 = vset.pattern.permute.xlu0 2
      %1548 = vperm.xlu0 %1547, %v957
      %v1549 = vpop.permute.xlu0 %1548
      %1551 = vset.pattern.permute.xlu0 2
      %1552 = vperm.xlu0 %1551, %v958
      %v1553 = vpop.permute.xlu0 %1552
      %1555 = vset.pattern.permute.xlu0 2
      %1556 = vperm.xlu0 %1555, %v959
      %v1557 = vpop.permute.xlu0 %1556
      %1559 = vset.pattern.permute.xlu0 2
      %1560 = vperm.xlu0 %1559, %v960
      %v1561 = vpop.permute.xlu0 %1560
      %1563 = vset.pattern.permute.xlu0 2
      %1564 = vperm.xlu0 %1563, %v961
      %v1565 = vpop.permute.xlu0 %1564
      %1567 = vset.pattern.permute.xlu0 2
      %1568 = vperm.xlu0 %1567, %v962
      %v1569 = vpop.permute.xlu0 %1568
      %1571 = vset.pattern.permute.xlu0 2
      %1572 = vperm.xlu0 %1571, %v963
      %v1573 = vpop.permute.xlu0 %1572
      %1575 = vset.pattern.permute.xlu0 2
      %1576 = vperm.xlu0 %1575, %v964
      %v1577 = vpop.permute.xlu0 %1576
      %1579 = vset.pattern.permute.xlu0 2
      %1580 = vperm.xlu0 %1579, %v965
      %v1581 = vpop.permute.xlu0 %1580
      %1583 = vset.pattern.permute.xlu0 2
      %1584 = vperm.xlu0 %1583, %v966
      %v1585 = vpop.permute.xlu0 %1584
      %1587 = vset.pattern.permute.xlu0 2
      %1588 = vperm.xlu0 %1587, %v967
      %v1589 = vpop.permute.xlu0 %1588
      %1591 = vset.pattern.permute.xlu0 2
      %1592 = vperm.xlu0 %1591, %v968
      %v1593 = vpop.permute.xlu0 %1592
      %1595 = vset.pattern.permute.xlu0 2
      %1596 = vperm.xlu0 %1595, %v969
      %v1597 = vpop.permute.xlu0 %1596
      %1599 = vset.pattern.permute.xlu0 2
      %1600 = vperm.xlu0 %1599, %v970
      %v1601 = vpop.permute.xlu0 %1600
      %1603 = vset.pattern.permute.xlu0 2
      %1604 = vperm.xlu0 %1603, %v971
      %v1605 = vpop.permute.xlu0 %1604
      %1607 = vset.pattern.permute.xlu0 2
      %1608 = vperm.xlu0 %1607, %v972
      %v1609 = vpop.permute.xlu0 %1608
      %1611 = vset.pattern.permute.xlu0 2
      %1612 = vperm.xlu0 %1611, %v973
      %v1613 = vpop.permute.xlu0 %1612
      %v1615 = vmul.f32 %v1489, %v816
      %v1616 = vmul.f32 %v1493, %v819
      %v1617 = vmul.f32 %v1497, %v824
      %v1618 = vmul.f32 %v1501, %v827
      %v1619 = vmul.f32 %v1505, %v832
      %v1620 = vmul.f32 %v1509, %v835
      %v1621 = vmul.f32 %v1513, %v840
      %v1622 = vmul.f32 %v1517, %v843
      %v1623 = vmul.f32 %v1521, %v848
      %v1624 = vmul.f32 %v1525, %v851
      %v1625 = vmul.f32 %v1529, %v856
      %v1626 = vmul.f32 %v1533, %v859
      %v1627 = vmul.f32 %v1537, %v864
      %v1628 = vmul.f32 %v1541, %v867
      %v1629 = vmul.f32 %v1545, %v872
      %v1630 = vmul.f32 %v1549, %v875
      %v1631 = vmul.f32 %v1553, %v880
      %v1632 = vmul.f32 %v1557, %v883
      %v1633 = vmul.f32 %v1561, %v888
      %v1634 = vmul.f32 %v1565, %v891
      %v1635 = vmul.f32 %v1569, %v896
      %v1636 = vmul.f32 %v1573, %v899
      %v1637 = vmul.f32 %v1577, %v904
      %v1638 = vmul.f32 %v1581, %v907
      %v1639 = vmul.f32 %v1585, %v912
      %v1640 = vmul.f32 %v1589, %v915
      %v1641 = vmul.f32 %v1593, %v920
      %v1642 = vmul.f32 %v1597, %v923
      %v1643 = vmul.f32 %v1601, %v928
      %v1644 = vmul.f32 %v1605, %v931
      %v1645 = vmul.f32 %v1609, %v936
      %v1646 = vmul.f32 %v1613, %v939
      %vm1647 = vcmask 1046528
      %v1648 = vrot.slane %v816, 1
      %v1649 = vrot.slane %v819, 1
      %v1650 = vsel %vm1647, %v1648, %v1649
      %v1651 = vrot.slane %v824, 1
      %v1652 = vsel %vm1647, %v1649, %v1651
      %v1653 = vrot.slane %v827, 1
      %v1654 = vsel %vm1647, %v1651, %v1653
      %v1655 = vrot.slane %v832, 1
      %v1656 = vsel %vm1647, %v1653, %v1655
      %v1657 = vrot.slane %v835, 1
      %v1658 = vsel %vm1647, %v1655, %v1657
      %v1659 = vrot.slane %v840, 1
      %v1660 = vsel %vm1647, %v1657, %v1659
      %v1661 = vrot.slane %v843, 1
      %v1662 = vsel %vm1647, %v1659, %v1661
      %v1663 = vrot.slane %v848, 1
      %v1664 = vsel %vm1647, %v1661, %v1663
      %v1665 = vrot.slane %v851, 1
      %v1666 = vsel %vm1647, %v1663, %v1665
      %v1667 = vrot.slane %v856, 1
      %v1668 = vsel %vm1647, %v1665, %v1667
      %v1669 = vrot.slane %v859, 1
      %v1670 = vsel %vm1647, %v1667, %v1669
      %v1671 = vrot.slane %v864, 1
      %v1672 = vsel %vm1647, %v1669, %v1671
      %v1673 = vrot.slane %v867, 1
      %v1674 = vsel %vm1647, %v1671, %v1673
      %v1675 = vrot.slane %v872, 1
      %v1676 = vsel %vm1647, %v1673, %v1675
      %v1677 = vrot.slane %v875, 1
      %v1678 = vsel %vm1647, %v1675, %v1677
      %v1679 = vrot.slane %v880, 1
      %v1680 = vsel %vm1647, %v1677, %v1679
      %v1681 = vrot.slane %v883, 1
      %v1682 = vsel %vm1647, %v1679, %v1681
      %v1683 = vrot.slane %v888, 1
      %v1684 = vsel %vm1647, %v1681, %v1683
      %v1685 = vrot.slane %v891, 1
      %v1686 = vsel %vm1647, %v1683, %v1685
      %v1687 = vrot.slane %v896, 1
      %v1688 = vsel %vm1647, %v1685, %v1687
      %v1689 = vrot.slane %v899, 1
      %v1690 = vsel %vm1647, %v1687, %v1689
      %v1691 = vrot.slane %v904, 1
      %v1692 = vsel %vm1647, %v1689, %v1691
      %v1693 = vrot.slane %v907, 1
      %v1694 = vsel %vm1647, %v1691, %v1693
      %v1695 = vrot.slane %v912, 1
      %v1696 = vsel %vm1647, %v1693, %v1695
      %v1697 = vrot.slane %v915, 1
      %v1698 = vsel %vm1647, %v1695, %v1697
      %v1699 = vrot.slane %v920, 1
      %v1700 = vsel %vm1647, %v1697, %v1699
      %v1701 = vrot.slane %v923, 1
      %v1702 = vsel %vm1647, %v1699, %v1701
      %v1703 = vrot.slane %v928, 1
      %v1704 = vsel %vm1647, %v1701, %v1703
      %v1705 = vrot.slane %v931, 1
      %v1706 = vsel %vm1647, %v1703, %v1705
      %v1707 = vrot.slane %v936, 1
      %v1708 = vsel %vm1647, %v1705, %v1707
      %v1709 = vrot.slane %v939, 1
      %v1710 = vsel %vm1647, %v1707, %v1709
      %v1743 = vsel %vm1647, %v1709, 0.0
      %1744 = vset.pattern.permute.xlu0 3
      %1745 = vperm.xlu0 %1744, %v942
      %v1746 = vpop.permute.xlu0 %1745
      %1748 = vset.pattern.permute.xlu0 3
      %1749 = vperm.xlu0 %1748, %v943
      %v1750 = vpop.permute.xlu0 %1749
      %1752 = vset.pattern.permute.xlu0 3
      %1753 = vperm.xlu0 %1752, %v944
      %v1754 = vpop.permute.xlu0 %1753
      %1756 = vset.pattern.permute.xlu0 3
      %1757 = vperm.xlu0 %1756, %v945
      %v1758 = vpop.permute.xlu0 %1757
      %1760 = vset.pattern.permute.xlu0 3
      %1761 = vperm.xlu0 %1760, %v946
      %v1762 = vpop.permute.xlu0 %1761
      %1764 = vset.pattern.permute.xlu0 3
      %1765 = vperm.xlu0 %1764, %v947
      %v1766 = vpop.permute.xlu0 %1765
      %1768 = vset.pattern.permute.xlu0 3
      %1769 = vperm.xlu0 %1768, %v948
      %v1770 = vpop.permute.xlu0 %1769
      %1772 = vset.pattern.permute.xlu0 3
      %1773 = vperm.xlu0 %1772, %v949
      %v1774 = vpop.permute.xlu0 %1773
      %1776 = vset.pattern.permute.xlu0 3
      %1777 = vperm.xlu0 %1776, %v950
      %v1778 = vpop.permute.xlu0 %1777
      %1780 = vset.pattern.permute.xlu0 3
      %1781 = vperm.xlu0 %1780, %v951
      %v1782 = vpop.permute.xlu0 %1781
      %1784 = vset.pattern.permute.xlu0 3
      %1785 = vperm.xlu0 %1784, %v952
      %v1786 = vpop.permute.xlu0 %1785
      %1788 = vset.pattern.permute.xlu0 3
      %1789 = vperm.xlu0 %1788, %v953
      %v1790 = vpop.permute.xlu0 %1789
      %1792 = vset.pattern.permute.xlu0 3
      %1793 = vperm.xlu0 %1792, %v954
      %v1794 = vpop.permute.xlu0 %1793
      %1796 = vset.pattern.permute.xlu0 3
      %1797 = vperm.xlu0 %1796, %v955
      %v1798 = vpop.permute.xlu0 %1797
      %1800 = vset.pattern.permute.xlu0 3
      %1801 = vperm.xlu0 %1800, %v956
      %v1802 = vpop.permute.xlu0 %1801
      %1804 = vset.pattern.permute.xlu0 3
      %1805 = vperm.xlu0 %1804, %v957
      %v1806 = vpop.permute.xlu0 %1805
      %1808 = vset.pattern.permute.xlu0 3
      %1809 = vperm.xlu0 %1808, %v958
      %v1810 = vpop.permute.xlu0 %1809
      %1812 = vset.pattern.permute.xlu0 3
      %1813 = vperm.xlu0 %1812, %v959
      %v1814 = vpop.permute.xlu0 %1813
      %1816 = vset.pattern.permute.xlu0 3
      %1817 = vperm.xlu0 %1816, %v960
      %v1818 = vpop.permute.xlu0 %1817
      %1820 = vset.pattern.permute.xlu0 3
      %1821 = vperm.xlu0 %1820, %v961
      %v1822 = vpop.permute.xlu0 %1821
      %1824 = vset.pattern.permute.xlu0 3
      %1825 = vperm.xlu0 %1824, %v962
      %v1826 = vpop.permute.xlu0 %1825
      %1828 = vset.pattern.permute.xlu0 3
      %1829 = vperm.xlu0 %1828, %v963
      %v1830 = vpop.permute.xlu0 %1829
      %1832 = vset.pattern.permute.xlu0 3
      %1833 = vperm.xlu0 %1832, %v964
      %v1834 = vpop.permute.xlu0 %1833
      %1836 = vset.pattern.permute.xlu0 3
      %1837 = vperm.xlu0 %1836, %v965
      %v1838 = vpop.permute.xlu0 %1837
      %1840 = vset.pattern.permute.xlu0 3
      %1841 = vperm.xlu0 %1840, %v966
      %v1842 = vpop.permute.xlu0 %1841
      %1844 = vset.pattern.permute.xlu0 3
      %1845 = vperm.xlu0 %1844, %v967
      %v1846 = vpop.permute.xlu0 %1845
      %1848 = vset.pattern.permute.xlu0 3
      %1849 = vperm.xlu0 %1848, %v968
      %v1850 = vpop.permute.xlu0 %1849
      %1852 = vset.pattern.permute.xlu0 3
      %1853 = vperm.xlu0 %1852, %v969
      %v1854 = vpop.permute.xlu0 %1853
      %1856 = vset.pattern.permute.xlu0 3
      %1857 = vperm.xlu0 %1856, %v970
      %v1858 = vpop.permute.xlu0 %1857
      %1860 = vset.pattern.permute.xlu0 3
      %1861 = vperm.xlu0 %1860, %v971
      %v1862 = vpop.permute.xlu0 %1861
      %1864 = vset.pattern.permute.xlu0 3
      %1865 = vperm.xlu0 %1864, %v972
      %v1866 = vpop.permute.xlu0 %1865
      %1868 = vset.pattern.permute.xlu0 3
      %1869 = vperm.xlu0 %1868, %v973
      %v1870 = vpop.permute.xlu0 %1869
      %v1872 = vmul.f32 %v1746, %v1650
      %v1873 = vmul.f32 %v1750, %v1652
      %v1874 = vmul.f32 %v1754, %v1654
      %v1875 = vmul.f32 %v1758, %v1656
      %v1876 = vmul.f32 %v1762, %v1658
      %v1877 = vmul.f32 %v1766, %v1660
      %v1878 = vmul.f32 %v1770, %v1662
      %v1879 = vmul.f32 %v1774, %v1664
      %v1880 = vmul.f32 %v1778, %v1666
      %v1881 = vmul.f32 %v1782, %v1668
      %v1882 = vmul.f32 %v1786, %v1670
      %v1883 = vmul.f32 %v1790, %v1672
      %v1884 = vmul.f32 %v1794, %v1674
      %v1885 = vmul.f32 %v1798, %v1676
      %v1886 = vmul.f32 %v1802, %v1678
      %v1887 = vmul.f32 %v1806, %v1680
      %v1888 = vmul.f32 %v1810, %v1682
      %v1889 = vmul.f32 %v1814, %v1684
      %v1890 = vmul.f32 %v1818, %v1686
      %v1891 = vmul.f32 %v1822, %v1688
      %v1892 = vmul.f32 %v1826, %v1690
      %v1893 = vmul.f32 %v1830, %v1692
      %v1894 = vmul.f32 %v1834, %v1694
      %v1895 = vmul.f32 %v1838, %v1696
      %v1896 = vmul.f32 %v1842, %v1698
      %v1897 = vmul.f32 %v1846, %v1700
      %v1898 = vmul.f32 %v1850, %v1702
      %v1899 = vmul.f32 %v1854, %v1704
      %v1900 = vmul.f32 %v1858, %v1706
      %v1901 = vmul.f32 %v1862, %v1708
      %v1902 = vmul.f32 %v1866, %v1710
      %v1903 = vmul.f32 %v1870, %v1743
      %v1904 = vadd.f32 %v1615, %v1872
      %v1905 = vadd.f32 %v1616, %v1873
      %v1906 = vadd.f32 %v1617, %v1874
      %v1907 = vadd.f32 %v1618, %v1875
      %v1908 = vadd.f32 %v1619, %v1876
      %v1909 = vadd.f32 %v1620, %v1877
      %v1910 = vadd.f32 %v1621, %v1878
      %v1911 = vadd.f32 %v1622, %v1879
      %v1912 = vadd.f32 %v1623, %v1880
      %v1913 = vadd.f32 %v1624, %v1881
      %v1914 = vadd.f32 %v1625, %v1882
      %v1915 = vadd.f32 %v1626, %v1883
      %v1916 = vadd.f32 %v1627, %v1884
      %v1917 = vadd.f32 %v1628, %v1885
      %v1918 = vadd.f32 %v1629, %v1886
      %v1919 = vadd.f32 %v1630, %v1887
      %v1920 = vadd.f32 %v1631, %v1888
      %v1921 = vadd.f32 %v1632, %v1889
      %v1922 = vadd.f32 %v1633, %v1890
      %v1923 = vadd.f32 %v1634, %v1891
      %v1924 = vadd.f32 %v1635, %v1892
      %v1925 = vadd.f32 %v1636, %v1893
      %v1926 = vadd.f32 %v1637, %v1894
      %v1927 = vadd.f32 %v1638, %v1895
      %v1928 = vadd.f32 %v1639, %v1896
      %v1929 = vadd.f32 %v1640, %v1897
      %v1930 = vadd.f32 %v1641, %v1898
      %v1931 = vadd.f32 %v1642, %v1899
      %v1932 = vadd.f32 %v1643, %v1900
      %v1933 = vadd.f32 %v1644, %v1901
      %v1934 = vadd.f32 %v1645, %v1902
      %v1935 = vadd.f32 %v1646, %v1903
      %1936 = vset.pattern.permute.xlu0 4
      %1937 = vperm.xlu0 %1936, %v942
      %v1938 = vpop.permute.xlu0 %1937
      %1940 = vset.pattern.permute.xlu0 4
      %1941 = vperm.xlu0 %1940, %v943
      %v1942 = vpop.permute.xlu0 %1941
      %1944 = vset.pattern.permute.xlu0 4
      %1945 = vperm.xlu0 %1944, %v944
      %v1946 = vpop.permute.xlu0 %1945
      %1948 = vset.pattern.permute.xlu0 4
      %1949 = vperm.xlu0 %1948, %v945
      %v1950 = vpop.permute.xlu0 %1949
      %1952 = vset.pattern.permute.xlu0 4
      %1953 = vperm.xlu0 %1952, %v946
      %v1954 = vpop.permute.xlu0 %1953
      %1956 = vset.pattern.permute.xlu0 4
      %1957 = vperm.xlu0 %1956, %v947
      %v1958 = vpop.permute.xlu0 %1957
      %1960 = vset.pattern.permute.xlu0 4
      %1961 = vperm.xlu0 %1960, %v948
      %v1962 = vpop.permute.xlu0 %1961
      %1964 = vset.pattern.permute.xlu0 4
      %1965 = vperm.xlu0 %1964, %v949
      %v1966 = vpop.permute.xlu0 %1965
      %1968 = vset.pattern.permute.xlu0 4
      %1969 = vperm.xlu0 %1968, %v950
      %v1970 = vpop.permute.xlu0 %1969
      %1972 = vset.pattern.permute.xlu0 4
      %1973 = vperm.xlu0 %1972, %v951
      %v1974 = vpop.permute.xlu0 %1973
      %1976 = vset.pattern.permute.xlu0 4
      %1977 = vperm.xlu0 %1976, %v952
      %v1978 = vpop.permute.xlu0 %1977
      %1980 = vset.pattern.permute.xlu0 4
      %1981 = vperm.xlu0 %1980, %v953
      %v1982 = vpop.permute.xlu0 %1981
      %1984 = vset.pattern.permute.xlu0 4
      %1985 = vperm.xlu0 %1984, %v954
      %v1986 = vpop.permute.xlu0 %1985
      %1988 = vset.pattern.permute.xlu0 4
      %1989 = vperm.xlu0 %1988, %v955
      %v1990 = vpop.permute.xlu0 %1989
      %1992 = vset.pattern.permute.xlu0 4
      %1993 = vperm.xlu0 %1992, %v956
      %v1994 = vpop.permute.xlu0 %1993
      %1996 = vset.pattern.permute.xlu0 4
      %1997 = vperm.xlu0 %1996, %v957
      %v1998 = vpop.permute.xlu0 %1997
      %2000 = vset.pattern.permute.xlu0 4
      %2001 = vperm.xlu0 %2000, %v958
      %v2002 = vpop.permute.xlu0 %2001
      %2004 = vset.pattern.permute.xlu0 4
      %2005 = vperm.xlu0 %2004, %v959
      %v2006 = vpop.permute.xlu0 %2005
      %2008 = vset.pattern.permute.xlu0 4
      %2009 = vperm.xlu0 %2008, %v960
      %v2010 = vpop.permute.xlu0 %2009
      %2012 = vset.pattern.permute.xlu0 4
      %2013 = vperm.xlu0 %2012, %v961
      %v2014 = vpop.permute.xlu0 %2013
      %2016 = vset.pattern.permute.xlu0 4
      %2017 = vperm.xlu0 %2016, %v962
      %v2018 = vpop.permute.xlu0 %2017
      %2020 = vset.pattern.permute.xlu0 4
      %2021 = vperm.xlu0 %2020, %v963
      %v2022 = vpop.permute.xlu0 %2021
      %2024 = vset.pattern.permute.xlu0 4
      %2025 = vperm.xlu0 %2024, %v964
      %v2026 = vpop.permute.xlu0 %2025
      %2028 = vset.pattern.permute.xlu0 4
      %2029 = vperm.xlu0 %2028, %v965
      %v2030 = vpop.permute.xlu0 %2029
      %2032 = vset.pattern.permute.xlu0 4
      %2033 = vperm.xlu0 %2032, %v966
      %v2034 = vpop.permute.xlu0 %2033
      %2036 = vset.pattern.permute.xlu0 4
      %2037 = vperm.xlu0 %2036, %v967
      %v2038 = vpop.permute.xlu0 %2037
      %2040 = vset.pattern.permute.xlu0 4
      %2041 = vperm.xlu0 %2040, %v968
      %v2042 = vpop.permute.xlu0 %2041
      %2044 = vset.pattern.permute.xlu0 4
      %2045 = vperm.xlu0 %2044, %v969
      %v2046 = vpop.permute.xlu0 %2045
      %2048 = vset.pattern.permute.xlu0 4
      %2049 = vperm.xlu0 %2048, %v970
      %v2050 = vpop.permute.xlu0 %2049
      %2052 = vset.pattern.permute.xlu0 4
      %2053 = vperm.xlu0 %2052, %v971
      %v2054 = vpop.permute.xlu0 %2053
      %2056 = vset.pattern.permute.xlu0 4
      %2057 = vperm.xlu0 %2056, %v972
      %v2058 = vpop.permute.xlu0 %2057
      %2060 = vset.pattern.permute.xlu0 4
      %2061 = vperm.xlu0 %2060, %v973
      %v2062 = vpop.permute.xlu0 %2061
      %v2064 = vmul.f32 %v1938, 0.0
      %v2065 = vmul.f32 %v1942, 0.0
      %v2066 = vmul.f32 %v1946, %v1455
      %v2067 = vmul.f32 %v1950, %v1456
      %v2068 = vmul.f32 %v1954, %v1457
      %v2069 = vmul.f32 %v1958, %v1458
      %v2070 = vmul.f32 %v1962, %v1459
      %v2071 = vmul.f32 %v1966, %v1460
      %v2072 = vmul.f32 %v1970, %v1461
      %v2073 = vmul.f32 %v1974, %v1462
      %v2074 = vmul.f32 %v1978, %v1463
      %v2075 = vmul.f32 %v1982, %v1464
      %v2076 = vmul.f32 %v1986, %v1465
      %v2077 = vmul.f32 %v1990, %v1466
      %v2078 = vmul.f32 %v1994, %v1467
      %v2079 = vmul.f32 %v1998, %v1468
      %v2080 = vmul.f32 %v2002, %v1469
      %v2081 = vmul.f32 %v2006, %v1470
      %v2082 = vmul.f32 %v2010, %v1471
      %v2083 = vmul.f32 %v2014, %v1472
      %v2084 = vmul.f32 %v2018, %v1473
      %v2085 = vmul.f32 %v2022, %v1474
      %v2086 = vmul.f32 %v2026, %v1475
      %v2087 = vmul.f32 %v2030, %v1476
      %v2088 = vmul.f32 %v2034, %v1477
      %v2089 = vmul.f32 %v2038, %v1478
      %v2090 = vmul.f32 %v2042, %v1479
      %v2091 = vmul.f32 %v2046, %v1480
      %v2092 = vmul.f32 %v2050, %v1481
      %v2093 = vmul.f32 %v2054, %v1482
      %v2094 = vmul.f32 %v2058, %v1483
      %v2095 = vmul.f32 %v2062, %v1484
      %2096 = vset.pattern.permute.xlu0 5
      %2097 = vperm.xlu0 %2096, %v942
      %v2098 = vpop.permute.xlu0 %2097
      %2100 = vset.pattern.permute.xlu0 5
      %2101 = vperm.xlu0 %2100, %v943
      %v2102 = vpop.permute.xlu0 %2101
      %2104 = vset.pattern.permute.xlu0 5
      %2105 = vperm.xlu0 %2104, %v944
      %v2106 = vpop.permute.xlu0 %2105
      %2108 = vset.pattern.permute.xlu0 5
      %2109 = vperm.xlu0 %2108, %v945
      %v2110 = vpop.permute.xlu0 %2109
      %2112 = vset.pattern.permute.xlu0 5
      %2113 = vperm.xlu0 %2112, %v946
      %v2114 = vpop.permute.xlu0 %2113
      %2116 = vset.pattern.permute.xlu0 5
      %2117 = vperm.xlu0 %2116, %v947
      %v2118 = vpop.permute.xlu0 %2117
      %2120 = vset.pattern.permute.xlu0 5
      %2121 = vperm.xlu0 %2120, %v948
      %v2122 = vpop.permute.xlu0 %2121
      %2124 = vset.pattern.permute.xlu0 5
      %2125 = vperm.xlu0 %2124, %v949
      %v2126 = vpop.permute.xlu0 %2125
      %2128 = vset.pattern.permute.xlu0 5
      %2129 = vperm.xlu0 %2128, %v950
      %v2130 = vpop.permute.xlu0 %2129
      %2132 = vset.pattern.permute.xlu0 5
      %2133 = vperm.xlu0 %2132, %v951
      %v2134 = vpop.permute.xlu0 %2133
      %2136 = vset.pattern.permute.xlu0 5
      %2137 = vperm.xlu0 %2136, %v952
      %v2138 = vpop.permute.xlu0 %2137
      %2140 = vset.pattern.permute.xlu0 5
      %2141 = vperm.xlu0 %2140, %v953
      %v2142 = vpop.permute.xlu0 %2141
      %2144 = vset.pattern.permute.xlu0 5
      %2145 = vperm.xlu0 %2144, %v954
      %v2146 = vpop.permute.xlu0 %2145
      %2148 = vset.pattern.permute.xlu0 5
      %2149 = vperm.xlu0 %2148, %v955
      %v2150 = vpop.permute.xlu0 %2149
      %2152 = vset.pattern.permute.xlu0 5
      %2153 = vperm.xlu0 %2152, %v956
      %v2154 = vpop.permute.xlu0 %2153
      %2156 = vset.pattern.permute.xlu0 5
      %2157 = vperm.xlu0 %2156, %v957
      %v2158 = vpop.permute.xlu0 %2157
      %2160 = vset.pattern.permute.xlu0 5
      %2161 = vperm.xlu0 %2160, %v958
      %v2162 = vpop.permute.xlu0 %2161
      %2164 = vset.pattern.permute.xlu0 5
      %2165 = vperm.xlu0 %2164, %v959
      %v2166 = vpop.permute.xlu0 %2165
      %2168 = vset.pattern.permute.xlu0 5
      %2169 = vperm.xlu0 %2168, %v960
      %v2170 = vpop.permute.xlu0 %2169
      %2172 = vset.pattern.permute.xlu0 5
      %2173 = vperm.xlu0 %2172, %v961
      %v2174 = vpop.permute.xlu0 %2173
      %2176 = vset.pattern.permute.xlu0 5
      %2177 = vperm.xlu0 %2176, %v962
      %v2178 = vpop.permute.xlu0 %2177
      %2180 = vset.pattern.permute.xlu0 5
      %2181 = vperm.xlu0 %2180, %v963
      %v2182 = vpop.permute.xlu0 %2181
      %2184 = vset.pattern.permute.xlu0 5
      %2185 = vperm.xlu0 %2184, %v964
      %v2186 = vpop.permute.xlu0 %2185
      %2188 = vset.pattern.permute.xlu0 5
      %2189 = vperm.xlu0 %2188, %v965
      %v2190 = vpop.permute.xlu0 %2189
      %2192 = vset.pattern.permute.xlu0 5
      %2193 = vperm.xlu0 %2192, %v966
      %v2194 = vpop.permute.xlu0 %2193
      %2196 = vset.pattern.permute.xlu0 5
      %2197 = vperm.xlu0 %2196, %v967
      %v2198 = vpop.permute.xlu0 %2197
      %2200 = vset.pattern.permute.xlu0 5
      %2201 = vperm.xlu0 %2200, %v968
      %v2202 = vpop.permute.xlu0 %2201
      %2204 = vset.pattern.permute.xlu0 5
      %2205 = vperm.xlu0 %2204, %v969
      %v2206 = vpop.permute.xlu0 %2205
      %2208 = vset.pattern.permute.xlu0 5
      %2209 = vperm.xlu0 %2208, %v970
      %v2210 = vpop.permute.xlu0 %2209
      %2212 = vset.pattern.permute.xlu0 5
      %2213 = vperm.xlu0 %2212, %v971
      %v2214 = vpop.permute.xlu0 %2213
      %2216 = vset.pattern.permute.xlu0 5
      %2217 = vperm.xlu0 %2216, %v972
      %v2218 = vpop.permute.xlu0 %2217
      %2220 = vset.pattern.permute.xlu0 5
      %2221 = vperm.xlu0 %2220, %v973
      %v2222 = vpop.permute.xlu0 %2221
      %v2224 = vmul.f32 %v2098, %v1455
      %v2225 = vmul.f32 %v2102, %v1456
      %v2226 = vmul.f32 %v2106, %v1457
      %v2227 = vmul.f32 %v2110, %v1458
      %v2228 = vmul.f32 %v2114, %v1459
      %v2229 = vmul.f32 %v2118, %v1460
      %v2230 = vmul.f32 %v2122, %v1461
      %v2231 = vmul.f32 %v2126, %v1462
      %v2232 = vmul.f32 %v2130, %v1463
      %v2233 = vmul.f32 %v2134, %v1464
      %v2234 = vmul.f32 %v2138, %v1465
      %v2235 = vmul.f32 %v2142, %v1466
      %v2236 = vmul.f32 %v2146, %v1467
      %v2237 = vmul.f32 %v2150, %v1468
      %v2238 = vmul.f32 %v2154, %v1469
      %v2239 = vmul.f32 %v2158, %v1470
      %v2240 = vmul.f32 %v2162, %v1471
      %v2241 = vmul.f32 %v2166, %v1472
      %v2242 = vmul.f32 %v2170, %v1473
      %v2243 = vmul.f32 %v2174, %v1474
      %v2244 = vmul.f32 %v2178, %v1475
      %v2245 = vmul.f32 %v2182, %v1476
      %v2246 = vmul.f32 %v2186, %v1477
      %v2247 = vmul.f32 %v2190, %v1478
      %v2248 = vmul.f32 %v2194, %v1479
      %v2249 = vmul.f32 %v2198, %v1480
      %v2250 = vmul.f32 %v2202, %v1481
      %v2251 = vmul.f32 %v2206, %v1482
      %v2252 = vmul.f32 %v2210, %v1483
      %v2253 = vmul.f32 %v2214, %v1484
      %v2254 = vmul.f32 %v2218, %v1485
      %v2255 = vmul.f32 %v2222, %v1486
      %v2256 = vadd.f32 %v2064, %v2224
      %v2257 = vadd.f32 %v2065, %v2225
      %v2258 = vadd.f32 %v2066, %v2226
      %v2259 = vadd.f32 %v2067, %v2227
      %v2260 = vadd.f32 %v2068, %v2228
      %v2261 = vadd.f32 %v2069, %v2229
      %v2262 = vadd.f32 %v2070, %v2230
      %v2263 = vadd.f32 %v2071, %v2231
      %v2264 = vadd.f32 %v2072, %v2232
      %v2265 = vadd.f32 %v2073, %v2233
      %v2266 = vadd.f32 %v2074, %v2234
      %v2267 = vadd.f32 %v2075, %v2235
      %v2268 = vadd.f32 %v2076, %v2236
      %v2269 = vadd.f32 %v2077, %v2237
      %v2270 = vadd.f32 %v2078, %v2238
      %v2271 = vadd.f32 %v2079, %v2239
      %v2272 = vadd.f32 %v2080, %v2240
      %v2273 = vadd.f32 %v2081, %v2241
      %v2274 = vadd.f32 %v2082, %v2242
      %v2275 = vadd.f32 %v2083, %v2243
      %v2276 = vadd.f32 %v2084, %v2244
      %v2277 = vadd.f32 %v2085, %v2245
      %v2278 = vadd.f32 %v2086, %v2246
      %v2279 = vadd.f32 %v2087, %v2247
      %v2280 = vadd.f32 %v2088, %v2248
      %v2281 = vadd.f32 %v2089, %v2249
      %v2282 = vadd.f32 %v2090, %v2250
      %v2283 = vadd.f32 %v2091, %v2251
      %v2284 = vadd.f32 %v2092, %v2252
      %v2285 = vadd.f32 %v2093, %v2253
      %v2286 = vadd.f32 %v2094, %v2254
      %v2287 = vadd.f32 %v2095, %v2255
      %vm2288 = vcmask 31744
      %2289 = vst.msk [vmem:[%s251] sm:$0xff] %vm2288, %v2256
      %2290 = vst.msk [vmem:[%s251 + $0x8] sm:$0xff] %vm2288, %v2257
      %2291 = vst.msk [vmem:[%s251 + $0x10] sm:$0xff] %vm2288, %v2258
      %2292 = vst.msk [vmem:[%s251 + $0x18] sm:$0xff] %vm2288, %v2259
      %2293 = vst.msk [vmem:[%s251 + $0x20] sm:$0xff] %vm2288, %v2260
      %2294 = vst.msk [vmem:[%s251 + $0x28] sm:$0xff] %vm2288, %v2261
      %2295 = vst.msk [vmem:[%s251 + $0x30] sm:$0xff] %vm2288, %v2262
      %2296 = vst.msk [vmem:[%s251 + $0x38] sm:$0xff] %vm2288, %v2263
      %2297 = vst.msk [vmem:[%s251 + $0x40] sm:$0xff] %vm2288, %v2264
      %2298 = vst.msk [vmem:[%s251 + $0x48] sm:$0xff] %vm2288, %v2265
      %2299 = vst.msk [vmem:[%s251 + $0x50] sm:$0xff] %vm2288, %v2266
      %2300 = vst.msk [vmem:[%s251 + $0x58] sm:$0xff] %vm2288, %v2267
      %2301 = vst.msk [vmem:[%s251 + $0x60] sm:$0xff] %vm2288, %v2268
      %2302 = vst.msk [vmem:[%s251 + $0x68] sm:$0xff] %vm2288, %v2269
      %2303 = vst.msk [vmem:[%s251 + $0x70] sm:$0xff] %vm2288, %v2270
      %2304 = vst.msk [vmem:[%s251 + $0x78] sm:$0xff] %vm2288, %v2271
      %2305 = vst.msk [vmem:[%s251 + $0x80] sm:$0xff] %vm2288, %v2272
      %2306 = vst.msk [vmem:[%s251 + $0x88] sm:$0xff] %vm2288, %v2273
      %2307 = vst.msk [vmem:[%s251 + $0x90] sm:$0xff] %vm2288, %v2274
      %2308 = vst.msk [vmem:[%s251 + $0x98] sm:$0xff] %vm2288, %v2275
      %2309 = vst.msk [vmem:[%s251 + $0xa0] sm:$0xff] %vm2288, %v2276
      %2310 = vst.msk [vmem:[%s251 + $0xa8] sm:$0xff] %vm2288, %v2277
      %2311 = vst.msk [vmem:[%s251 + $0xb0] sm:$0xff] %vm2288, %v2278
      %2312 = vst.msk [vmem:[%s251 + $0xb8] sm:$0xff] %vm2288, %v2279
      %2313 = vst.msk [vmem:[%s251 + $0xc0] sm:$0xff] %vm2288, %v2280
      %2314 = vst.msk [vmem:[%s251 + $0xc8] sm:$0xff] %vm2288, %v2281
      %2315 = vst.msk [vmem:[%s251 + $0xd0] sm:$0xff] %vm2288, %v2282
      %2316 = vst.msk [vmem:[%s251 + $0xd8] sm:$0xff] %vm2288, %v2283
      %2317 = vst.msk [vmem:[%s251 + $0xe0] sm:$0xff] %vm2288, %v2284
      %2318 = vst.msk [vmem:[%s251 + $0xe8] sm:$0xff] %vm2288, %v2285
      %2319 = vst.msk [vmem:[%s251 + $0xf0] sm:$0xff] %vm2288, %v2286
      %2320 = vst.msk [vmem:[%s251 + $0xf8] sm:$0xff] %vm2288, %v2287
      %2321 = vset.pattern.permute.xlu0 6
      %2322 = vperm.xlu0 %2321, %v942
      %v2323 = vpop.permute.xlu0 %2322
      %2325 = vset.pattern.permute.xlu0 6
      %2326 = vperm.xlu0 %2325, %v943
      %v2327 = vpop.permute.xlu0 %2326
      %2329 = vset.pattern.permute.xlu0 6
      %2330 = vperm.xlu0 %2329, %v944
      %v2331 = vpop.permute.xlu0 %2330
      %2333 = vset.pattern.permute.xlu0 6
      %2334 = vperm.xlu0 %2333, %v945
      %v2335 = vpop.permute.xlu0 %2334
      %2337 = vset.pattern.permute.xlu0 6
      %2338 = vperm.xlu0 %2337, %v946
      %v2339 = vpop.permute.xlu0 %2338
      %2341 = vset.pattern.permute.xlu0 6
      %2342 = vperm.xlu0 %2341, %v947
      %v2343 = vpop.permute.xlu0 %2342
      %2345 = vset.pattern.permute.xlu0 6
      %2346 = vperm.xlu0 %2345, %v948
      %v2347 = vpop.permute.xlu0 %2346
      %2349 = vset.pattern.permute.xlu0 6
      %2350 = vperm.xlu0 %2349, %v949
      %v2351 = vpop.permute.xlu0 %2350
      %2353 = vset.pattern.permute.xlu0 6
      %2354 = vperm.xlu0 %2353, %v950
      %v2355 = vpop.permute.xlu0 %2354
      %2357 = vset.pattern.permute.xlu0 6
      %2358 = vperm.xlu0 %2357, %v951
      %v2359 = vpop.permute.xlu0 %2358
      %2361 = vset.pattern.permute.xlu0 6
      %2362 = vperm.xlu0 %2361, %v952
      %v2363 = vpop.permute.xlu0 %2362
      %2365 = vset.pattern.permute.xlu0 6
      %2366 = vperm.xlu0 %2365, %v953
      %v2367 = vpop.permute.xlu0 %2366
      %2369 = vset.pattern.permute.xlu0 6
      %2370 = vperm.xlu0 %2369, %v954
      %v2371 = vpop.permute.xlu0 %2370
      %2373 = vset.pattern.permute.xlu0 6
      %2374 = vperm.xlu0 %2373, %v955
      %v2375 = vpop.permute.xlu0 %2374
      %2377 = vset.pattern.permute.xlu0 6
      %2378 = vperm.xlu0 %2377, %v956
      %v2379 = vpop.permute.xlu0 %2378
      %2381 = vset.pattern.permute.xlu0 6
      %2382 = vperm.xlu0 %2381, %v957
      %v2383 = vpop.permute.xlu0 %2382
      %2385 = vset.pattern.permute.xlu0 6
      %2386 = vperm.xlu0 %2385, %v958
      %v2387 = vpop.permute.xlu0 %2386
      %2389 = vset.pattern.permute.xlu0 6
      %2390 = vperm.xlu0 %2389, %v959
      %v2391 = vpop.permute.xlu0 %2390
      %2393 = vset.pattern.permute.xlu0 6
      %2394 = vperm.xlu0 %2393, %v960
      %v2395 = vpop.permute.xlu0 %2394
      %2397 = vset.pattern.permute.xlu0 6
      %2398 = vperm.xlu0 %2397, %v961
      %v2399 = vpop.permute.xlu0 %2398
      %2401 = vset.pattern.permute.xlu0 6
      %2402 = vperm.xlu0 %2401, %v962
      %v2403 = vpop.permute.xlu0 %2402
      %2405 = vset.pattern.permute.xlu0 6
      %2406 = vperm.xlu0 %2405, %v963
      %v2407 = vpop.permute.xlu0 %2406
      %2409 = vset.pattern.permute.xlu0 6
      %2410 = vperm.xlu0 %2409, %v964
      %v2411 = vpop.permute.xlu0 %2410
      %2413 = vset.pattern.permute.xlu0 6
      %2414 = vperm.xlu0 %2413, %v965
      %v2415 = vpop.permute.xlu0 %2414
      %2417 = vset.pattern.permute.xlu0 6
      %2418 = vperm.xlu0 %2417, %v966
      %v2419 = vpop.permute.xlu0 %2418
      %2421 = vset.pattern.permute.xlu0 6
      %2422 = vperm.xlu0 %2421, %v967
      %v2423 = vpop.permute.xlu0 %2422
      %2425 = vset.pattern.permute.xlu0 6
      %2426 = vperm.xlu0 %2425, %v968
      %v2427 = vpop.permute.xlu0 %2426
      %2429 = vset.pattern.permute.xlu0 6
      %2430 = vperm.xlu0 %2429, %v969
      %v2431 = vpop.permute.xlu0 %2430
      %2433 = vset.pattern.permute.xlu0 6
      %2434 = vperm.xlu0 %2433, %v970
      %v2435 = vpop.permute.xlu0 %2434
      %2437 = vset.pattern.permute.xlu0 6
      %2438 = vperm.xlu0 %2437, %v971
      %v2439 = vpop.permute.xlu0 %2438
      %2441 = vset.pattern.permute.xlu0 6
      %2442 = vperm.xlu0 %2441, %v972
      %v2443 = vpop.permute.xlu0 %2442
      %2445 = vset.pattern.permute.xlu0 6
      %2446 = vperm.xlu0 %2445, %v973
      %v2447 = vpop.permute.xlu0 %2446
      %v2449 = vmul.f32 %v2323, %v1455
      %v2450 = vmul.f32 %v2327, %v1456
      %v2451 = vmul.f32 %v2331, %v1457
      %v2452 = vmul.f32 %v2335, %v1458
      %v2453 = vmul.f32 %v2339, %v1459
      %v2454 = vmul.f32 %v2343, %v1460
      %v2455 = vmul.f32 %v2347, %v1461
      %v2456 = vmul.f32 %v2351, %v1462
      %v2457 = vmul.f32 %v2355, %v1463
      %v2458 = vmul.f32 %v2359, %v1464
      %v2459 = vmul.f32 %v2363, %v1465
      %v2460 = vmul.f32 %v2367, %v1466
      %v2461 = vmul.f32 %v2371, %v1467
      %v2462 = vmul.f32 %v2375, %v1468
      %v2463 = vmul.f32 %v2379, %v1469
      %v2464 = vmul.f32 %v2383, %v1470
      %v2465 = vmul.f32 %v2387, %v1471
      %v2466 = vmul.f32 %v2391, %v1472
      %v2467 = vmul.f32 %v2395, %v1473
      %v2468 = vmul.f32 %v2399, %v1474
      %v2469 = vmul.f32 %v2403, %v1475
      %v2470 = vmul.f32 %v2407, %v1476
      %v2471 = vmul.f32 %v2411, %v1477
      %v2472 = vmul.f32 %v2415, %v1478
      %v2473 = vmul.f32 %v2419, %v1479
      %v2474 = vmul.f32 %v2423, %v1480
      %v2475 = vmul.f32 %v2427, %v1481
      %v2476 = vmul.f32 %v2431, %v1482
      %v2477 = vmul.f32 %v2435, %v1483
      %v2478 = vmul.f32 %v2439, %v1484
      %v2479 = vmul.f32 %v2443, %v1485
      %v2480 = vmul.f32 %v2447, %v1486
      %2481 = vset.pattern.permute.xlu0 7
      %2482 = vperm.xlu0 %2481, %v942
      %v2483 = vpop.permute.xlu0 %2482
      %2485 = vset.pattern.permute.xlu0 7
      %2486 = vperm.xlu0 %2485, %v943
      %v2487 = vpop.permute.xlu0 %2486
      %2489 = vset.pattern.permute.xlu0 7
      %2490 = vperm.xlu0 %2489, %v944
      %v2491 = vpop.permute.xlu0 %2490
      %2493 = vset.pattern.permute.xlu0 7
      %2494 = vperm.xlu0 %2493, %v945
      %v2495 = vpop.permute.xlu0 %2494
      %2497 = vset.pattern.permute.xlu0 7
      %2498 = vperm.xlu0 %2497, %v946
      %v2499 = vpop.permute.xlu0 %2498
      %2501 = vset.pattern.permute.xlu0 7
      %2502 = vperm.xlu0 %2501, %v947
      %v2503 = vpop.permute.xlu0 %2502
      %2505 = vset.pattern.permute.xlu0 7
      %2506 = vperm.xlu0 %2505, %v948
      %v2507 = vpop.permute.xlu0 %2506
      %2509 = vset.pattern.permute.xlu0 7
      %2510 = vperm.xlu0 %2509, %v949
      %v2511 = vpop.permute.xlu0 %2510
      %2513 = vset.pattern.permute.xlu0 7
      %2514 = vperm.xlu0 %2513, %v950
      %v2515 = vpop.permute.xlu0 %2514
      %2517 = vset.pattern.permute.xlu0 7
      %2518 = vperm.xlu0 %2517, %v951
      %v2519 = vpop.permute.xlu0 %2518
      %2521 = vset.pattern.permute.xlu0 7
      %2522 = vperm.xlu0 %2521, %v952
      %v2523 = vpop.permute.xlu0 %2522
      %2525 = vset.pattern.permute.xlu0 7
      %2526 = vperm.xlu0 %2525, %v953
      %v2527 = vpop.permute.xlu0 %2526
      %2529 = vset.pattern.permute.xlu0 7
      %2530 = vperm.xlu0 %2529, %v954
      %v2531 = vpop.permute.xlu0 %2530
      %2533 = vset.pattern.permute.xlu0 7
      %2534 = vperm.xlu0 %2533, %v955
      %v2535 = vpop.permute.xlu0 %2534
      %2537 = vset.pattern.permute.xlu0 7
      %2538 = vperm.xlu0 %2537, %v956
      %v2539 = vpop.permute.xlu0 %2538
      %2541 = vset.pattern.permute.xlu0 7
      %2542 = vperm.xlu0 %2541, %v957
      %v2543 = vpop.permute.xlu0 %2542
      %2545 = vset.pattern.permute.xlu0 7
      %2546 = vperm.xlu0 %2545, %v958
      %v2547 = vpop.permute.xlu0 %2546
      %2549 = vset.pattern.permute.xlu0 7
      %2550 = vperm.xlu0 %2549, %v959
      %v2551 = vpop.permute.xlu0 %2550
      %2553 = vset.pattern.permute.xlu0 7
      %2554 = vperm.xlu0 %2553, %v960
      %v2555 = vpop.permute.xlu0 %2554
      %2557 = vset.pattern.permute.xlu0 7
      %2558 = vperm.xlu0 %2557, %v961
      %v2559 = vpop.permute.xlu0 %2558
      %2561 = vset.pattern.permute.xlu0 7
      %2562 = vperm.xlu0 %2561, %v962
      %v2563 = vpop.permute.xlu0 %2562
      %2565 = vset.pattern.permute.xlu0 7
      %2566 = vperm.xlu0 %2565, %v963
      %v2567 = vpop.permute.xlu0 %2566
      %2569 = vset.pattern.permute.xlu0 7
      %2570 = vperm.xlu0 %2569, %v964
      %v2571 = vpop.permute.xlu0 %2570
      %2573 = vset.pattern.permute.xlu0 7
      %2574 = vperm.xlu0 %2573, %v965
      %v2575 = vpop.permute.xlu0 %2574
      %2577 = vset.pattern.permute.xlu0 7
      %2578 = vperm.xlu0 %2577, %v966
      %v2579 = vpop.permute.xlu0 %2578
      %2581 = vset.pattern.permute.xlu0 7
      %2582 = vperm.xlu0 %2581, %v967
      %v2583 = vpop.permute.xlu0 %2582
      %2585 = vset.pattern.permute.xlu0 7
      %2586 = vperm.xlu0 %2585, %v968
      %v2587 = vpop.permute.xlu0 %2586
      %2589 = vset.pattern.permute.xlu0 7
      %2590 = vperm.xlu0 %2589, %v969
      %v2591 = vpop.permute.xlu0 %2590
      %2593 = vset.pattern.permute.xlu0 7
      %2594 = vperm.xlu0 %2593, %v970
      %v2595 = vpop.permute.xlu0 %2594
      %2597 = vset.pattern.permute.xlu0 7
      %2598 = vperm.xlu0 %2597, %v971
      %v2599 = vpop.permute.xlu0 %2598
      %2601 = vset.pattern.permute.xlu0 7
      %2602 = vperm.xlu0 %2601, %v972
      %v2603 = vpop.permute.xlu0 %2602
      %2605 = vset.pattern.permute.xlu0 7
      %2606 = vperm.xlu0 %2605, %v973
      %v2607 = vpop.permute.xlu0 %2606
      %v2609 = vmul.f32 %v2483, %v1457
      %v2610 = vmul.f32 %v2487, %v1458
      %v2611 = vmul.f32 %v2491, %v1459
      %v2612 = vmul.f32 %v2495, %v1460
      %v2613 = vmul.f32 %v2499, %v1461
      %v2614 = vmul.f32 %v2503, %v1462
      %v2615 = vmul.f32 %v2507, %v1463
      %v2616 = vmul.f32 %v2511, %v1464
      %v2617 = vmul.f32 %v2515, %v1465
      %v2618 = vmul.f32 %v2519, %v1466
      %v2619 = vmul.f32 %v2523, %v1467
      %v2620 = vmul.f32 %v2527, %v1468
      %v2621 = vmul.f32 %v2531, %v1469
      %v2622 = vmul.f32 %v2535, %v1470
      %v2623 = vmul.f32 %v2539, %v1471
      %v2624 = vmul.f32 %v2543, %v1472
      %v2625 = vmul.f32 %v2547, %v1473
      %v2626 = vmul.f32 %v2551, %v1474
      %v2627 = vmul.f32 %v2555, %v1475
      %v2628 = vmul.f32 %v2559, %v1476
      %v2629 = vmul.f32 %v2563, %v1477
      %v2630 = vmul.f32 %v2567, %v1478
      %v2631 = vmul.f32 %v2571, %v1479
      %v2632 = vmul.f32 %v2575, %v1480
      %v2633 = vmul.f32 %v2579, %v1481
      %v2634 = vmul.f32 %v2583, %v1482
      %v2635 = vmul.f32 %v2587, %v1483
      %v2636 = vmul.f32 %v2591, %v1484
      %v2637 = vmul.f32 %v2595, %v1485
      %v2638 = vmul.f32 %v2599, %v1486
      %v2639 = vmul.f32 %v2603, 0.0
      %v2640 = vmul.f32 %v2607, 0.0
      %v2641 = vadd.f32 %v2449, %v2609
      %v2642 = vadd.f32 %v2450, %v2610
      %v2643 = vadd.f32 %v2451, %v2611
      %v2644 = vadd.f32 %v2452, %v2612
      %v2645 = vadd.f32 %v2453, %v2613
      %v2646 = vadd.f32 %v2454, %v2614
      %v2647 = vadd.f32 %v2455, %v2615
      %v2648 = vadd.f32 %v2456, %v2616
      %v2649 = vadd.f32 %v2457, %v2617
      %v2650 = vadd.f32 %v2458, %v2618
      %v2651 = vadd.f32 %v2459, %v2619
      %v2652 = vadd.f32 %v2460, %v2620
      %v2653 = vadd.f32 %v2461, %v2621
      %v2654 = vadd.f32 %v2462, %v2622
      %v2655 = vadd.f32 %v2463, %v2623
      %v2656 = vadd.f32 %v2464, %v2624
      %v2657 = vadd.f32 %v2465, %v2625
      %v2658 = vadd.f32 %v2466, %v2626
      %v2659 = vadd.f32 %v2467, %v2627
      %v2660 = vadd.f32 %v2468, %v2628
      %v2661 = vadd.f32 %v2469, %v2629
      %v2662 = vadd.f32 %v2470, %v2630
      %v2663 = vadd.f32 %v2471, %v2631
      %v2664 = vadd.f32 %v2472, %v2632
      %v2665 = vadd.f32 %v2473, %v2633
      %v2666 = vadd.f32 %v2474, %v2634
      %v2667 = vadd.f32 %v2475, %v2635
      %v2668 = vadd.f32 %v2476, %v2636
      %v2669 = vadd.f32 %v2477, %v2637
      %v2670 = vadd.f32 %v2478, %v2638
      %v2671 = vadd.f32 %v2479, %v2639
      %v2672 = vadd.f32 %v2480, %v2640
      %s2673 = scalar_lea.vmem %s251, 512
      %2674 = vst.msk [vmem:[%s2673] sm:$0xff] %vm2288, %v2641
      %2675 = vst.msk [vmem:[%s2673 + $0x8] sm:$0xff] %vm2288, %v2642
      %2676 = vst.msk [vmem:[%s2673 + $0x10] sm:$0xff] %vm2288, %v2643
      %2677 = vst.msk [vmem:[%s2673 + $0x18] sm:$0xff] %vm2288, %v2644
      %2678 = vst.msk [vmem:[%s2673 + $0x20] sm:$0xff] %vm2288, %v2645
      %2679 = vst.msk [vmem:[%s2673 + $0x28] sm:$0xff] %vm2288, %v2646
      %2680 = vst.msk [vmem:[%s2673 + $0x30] sm:$0xff] %vm2288, %v2647
      %2681 = vst.msk [vmem:[%s2673 + $0x38] sm:$0xff] %vm2288, %v2648
      %2682 = vst.msk [vmem:[%s2673 + $0x40] sm:$0xff] %vm2288, %v2649
      %2683 = vst.msk [vmem:[%s2673 + $0x48] sm:$0xff] %vm2288, %v2650
      %2684 = vst.msk [vmem:[%s2673 + $0x50] sm:$0xff] %vm2288, %v2651
      %2685 = vst.msk [vmem:[%s2673 + $0x58] sm:$0xff] %vm2288, %v2652
      %2686 = vst.msk [vmem:[%s2673 + $0x60] sm:$0xff] %vm2288, %v2653
      %2687 = vst.msk [vmem:[%s2673 + $0x68] sm:$0xff] %vm2288, %v2654
      %2688 = vst.msk [vmem:[%s2673 + $0x70] sm:$0xff] %vm2288, %v2655
      %2689 = vst.msk [vmem:[%s2673 + $0x78] sm:$0xff] %vm2288, %v2656
      %2690 = vst.msk [vmem:[%s2673 + $0x80] sm:$0xff] %vm2288, %v2657
      %2691 = vst.msk [vmem:[%s2673 + $0x88] sm:$0xff] %vm2288, %v2658
      %2692 = vst.msk [vmem:[%s2673 + $0x90] sm:$0xff] %vm2288, %v2659
      %2693 = vst.msk [vmem:[%s2673 + $0x98] sm:$0xff] %vm2288, %v2660
      %2694 = vst.msk [vmem:[%s2673 + $0xa0] sm:$0xff] %vm2288, %v2661
      %2695 = vst.msk [vmem:[%s2673 + $0xa8] sm:$0xff] %vm2288, %v2662
      %2696 = vst.msk [vmem:[%s2673 + $0xb0] sm:$0xff] %vm2288, %v2663
      %2697 = vst.msk [vmem:[%s2673 + $0xb8] sm:$0xff] %vm2288, %v2664
      %2698 = vst.msk [vmem:[%s2673 + $0xc0] sm:$0xff] %vm2288, %v2665
      %2699 = vst.msk [vmem:[%s2673 + $0xc8] sm:$0xff] %vm2288, %v2666
      %2700 = vst.msk [vmem:[%s2673 + $0xd0] sm:$0xff] %vm2288, %v2667
      %2701 = vst.msk [vmem:[%s2673 + $0xd8] sm:$0xff] %vm2288, %v2668
      %2702 = vst.msk [vmem:[%s2673 + $0xe0] sm:$0xff] %vm2288, %v2669
      %2703 = vst.msk [vmem:[%s2673 + $0xe8] sm:$0xff] %vm2288, %v2670
      %2704 = vst.msk [vmem:[%s2673 + $0xf0] sm:$0xff] %vm2288, %v2671
      %2705 = vst.msk [vmem:[%s2673 + $0xf8] sm:$0xff] %vm2288, %v2672
      %v2706 = vmul.f32 %v1946, %v1904
      %v2707 = vmul.f32 %v1950, %v1905
      %v2708 = vmul.f32 %v1954, %v1906
      %v2709 = vmul.f32 %v1958, %v1907
      %v2710 = vmul.f32 %v1962, %v1908
      %v2711 = vmul.f32 %v1966, %v1909
      %v2712 = vmul.f32 %v1970, %v1910
      %v2713 = vmul.f32 %v1974, %v1911
      %v2714 = vmul.f32 %v1978, %v1912
      %v2715 = vmul.f32 %v1982, %v1913
      %v2716 = vmul.f32 %v1986, %v1914
      %v2717 = vmul.f32 %v1990, %v1915
      %v2718 = vmul.f32 %v1994, %v1916
      %v2719 = vmul.f32 %v1998, %v1917
      %v2720 = vmul.f32 %v2002, %v1918
      %v2721 = vmul.f32 %v2006, %v1919
      %v2722 = vmul.f32 %v2010, %v1920
      %v2723 = vmul.f32 %v2014, %v1921
      %v2724 = vmul.f32 %v2018, %v1922
      %v2725 = vmul.f32 %v2022, %v1923
      %v2726 = vmul.f32 %v2026, %v1924
      %v2727 = vmul.f32 %v2030, %v1925
      %v2728 = vmul.f32 %v2034, %v1926
      %v2729 = vmul.f32 %v2038, %v1927
      %v2730 = vmul.f32 %v2042, %v1928
      %v2731 = vmul.f32 %v2046, %v1929
      %v2732 = vmul.f32 %v2050, %v1930
      %v2733 = vmul.f32 %v2054, %v1931
      %v2734 = vmul.f32 %v2058, %v1932
      %v2735 = vmul.f32 %v2062, %v1933
      %v2736 = vmul.f32 %v2098, %v1904
      %v2737 = vmul.f32 %v2102, %v1905
      %v2738 = vmul.f32 %v2106, %v1906
      %v2739 = vmul.f32 %v2110, %v1907
      %v2740 = vmul.f32 %v2114, %v1908
      %v2741 = vmul.f32 %v2118, %v1909
      %v2742 = vmul.f32 %v2122, %v1910
      %v2743 = vmul.f32 %v2126, %v1911
      %v2744 = vmul.f32 %v2130, %v1912
      %v2745 = vmul.f32 %v2134, %v1913
      %v2746 = vmul.f32 %v2138, %v1914
      %v2747 = vmul.f32 %v2142, %v1915
      %v2748 = vmul.f32 %v2146, %v1916
      %v2749 = vmul.f32 %v2150, %v1917
      %v2750 = vmul.f32 %v2154, %v1918
      %v2751 = vmul.f32 %v2158, %v1919
      %v2752 = vmul.f32 %v2162, %v1920
      %v2753 = vmul.f32 %v2166, %v1921
      %v2754 = vmul.f32 %v2170, %v1922
      %v2755 = vmul.f32 %v2174, %v1923
      %v2756 = vmul.f32 %v2178, %v1924
      %v2757 = vmul.f32 %v2182, %v1925
      %v2758 = vmul.f32 %v2186, %v1926
      %v2759 = vmul.f32 %v2190, %v1927
      %v2760 = vmul.f32 %v2194, %v1928
      %v2761 = vmul.f32 %v2198, %v1929
      %v2762 = vmul.f32 %v2202, %v1930
      %v2763 = vmul.f32 %v2206, %v1931
      %v2764 = vmul.f32 %v2210, %v1932
      %v2765 = vmul.f32 %v2214, %v1933
      %v2766 = vmul.f32 %v2218, %v1934
      %v2767 = vmul.f32 %v2222, %v1935
      %v2768 = vadd.f32 %v2064, %v2736
      %v2769 = vadd.f32 %v2065, %v2737
      %v2770 = vadd.f32 %v2706, %v2738
      %v2771 = vadd.f32 %v2707, %v2739
      %v2772 = vadd.f32 %v2708, %v2740
      %v2773 = vadd.f32 %v2709, %v2741
      %v2774 = vadd.f32 %v2710, %v2742
      %v2775 = vadd.f32 %v2711, %v2743
      %v2776 = vadd.f32 %v2712, %v2744
      %v2777 = vadd.f32 %v2713, %v2745
      %v2778 = vadd.f32 %v2714, %v2746
      %v2779 = vadd.f32 %v2715, %v2747
      %v2780 = vadd.f32 %v2716, %v2748
      %v2781 = vadd.f32 %v2717, %v2749
      %v2782 = vadd.f32 %v2718, %v2750
      %v2783 = vadd.f32 %v2719, %v2751
      %v2784 = vadd.f32 %v2720, %v2752
      %v2785 = vadd.f32 %v2721, %v2753
      %v2786 = vadd.f32 %v2722, %v2754
      %v2787 = vadd.f32 %v2723, %v2755
      %v2788 = vadd.f32 %v2724, %v2756
      %v2789 = vadd.f32 %v2725, %v2757
      %v2790 = vadd.f32 %v2726, %v2758
      %v2791 = vadd.f32 %v2727, %v2759
      %v2792 = vadd.f32 %v2728, %v2760
      %v2793 = vadd.f32 %v2729, %v2761
      %v2794 = vadd.f32 %v2730, %v2762
      %v2795 = vadd.f32 %v2731, %v2763
      %v2796 = vadd.f32 %v2732, %v2764
      %v2797 = vadd.f32 %v2733, %v2765
      %v2798 = vadd.f32 %v2734, %v2766
      %v2799 = vadd.f32 %v2735, %v2767
      %s2800 = scalar_lea.vmem %s251, 256
      %2801 = vst.msk [vmem:[%s2800] sm:$0xff] %vm2288, %v2768
      %2802 = vst.msk [vmem:[%s2800 + $0x8] sm:$0xff] %vm2288, %v2769
      %2803 = vst.msk [vmem:[%s2800 + $0x10] sm:$0xff] %vm2288, %v2770
      %2804 = vst.msk [vmem:[%s2800 + $0x18] sm:$0xff] %vm2288, %v2771
      %2805 = vst.msk [vmem:[%s2800 + $0x20] sm:$0xff] %vm2288, %v2772
      %2806 = vst.msk [vmem:[%s2800 + $0x28] sm:$0xff] %vm2288, %v2773
      %2807 = vst.msk [vmem:[%s2800 + $0x30] sm:$0xff] %vm2288, %v2774
      %2808 = vst.msk [vmem:[%s2800 + $0x38] sm:$0xff] %vm2288, %v2775
      %2809 = vst.msk [vmem:[%s2800 + $0x40] sm:$0xff] %vm2288, %v2776
      %2810 = vst.msk [vmem:[%s2800 + $0x48] sm:$0xff] %vm2288, %v2777
      %2811 = vst.msk [vmem:[%s2800 + $0x50] sm:$0xff] %vm2288, %v2778
      %2812 = vst.msk [vmem:[%s2800 + $0x58] sm:$0xff] %vm2288, %v2779
      %2813 = vst.msk [vmem:[%s2800 + $0x60] sm:$0xff] %vm2288, %v2780
      %2814 = vst.msk [vmem:[%s2800 + $0x68] sm:$0xff] %vm2288, %v2781
      %2815 = vst.msk [vmem:[%s2800 + $0x70] sm:$0xff] %vm2288, %v2782
      %2816 = vst.msk [vmem:[%s2800 + $0x78] sm:$0xff] %vm2288, %v2783
      %2817 = vst.msk [vmem:[%s2800 + $0x80] sm:$0xff] %vm2288, %v2784
      %2818 = vst.msk [vmem:[%s2800 + $0x88] sm:$0xff] %vm2288, %v2785
      %2819 = vst.msk [vmem:[%s2800 + $0x90] sm:$0xff] %vm2288, %v2786
      %2820 = vst.msk [vmem:[%s2800 + $0x98] sm:$0xff] %vm2288, %v2787
      %2821 = vst.msk [vmem:[%s2800 + $0xa0] sm:$0xff] %vm2288, %v2788
      %2822 = vst.msk [vmem:[%s2800 + $0xa8] sm:$0xff] %vm2288, %v2789
      %2823 = vst.msk [vmem:[%s2800 + $0xb0] sm:$0xff] %vm2288, %v2790
      %2824 = vst.msk [vmem:[%s2800 + $0xb8] sm:$0xff] %vm2288, %v2791
      %2825 = vst.msk [vmem:[%s2800 + $0xc0] sm:$0xff] %vm2288, %v2792
      %2826 = vst.msk [vmem:[%s2800 + $0xc8] sm:$0xff] %vm2288, %v2793
      %2827 = vst.msk [vmem:[%s2800 + $0xd0] sm:$0xff] %vm2288, %v2794
      %2828 = vst.msk [vmem:[%s2800 + $0xd8] sm:$0xff] %vm2288, %v2795
      %2829 = vst.msk [vmem:[%s2800 + $0xe0] sm:$0xff] %vm2288, %v2796
      %2830 = vst.msk [vmem:[%s2800 + $0xe8] sm:$0xff] %vm2288, %v2797
      %2831 = vst.msk [vmem:[%s2800 + $0xf0] sm:$0xff] %vm2288, %v2798
      %2832 = vst.msk [vmem:[%s2800 + $0xf8] sm:$0xff] %vm2288, %v2799
      %v2833 = vmul.f32 %v2323, %v1904
      %v2834 = vmul.f32 %v2327, %v1905
      %v2835 = vmul.f32 %v2331, %v1906
      %v2836 = vmul.f32 %v2335, %v1907
      %v2837 = vmul.f32 %v2339, %v1908
      %v2838 = vmul.f32 %v2343, %v1909
      %v2839 = vmul.f32 %v2347, %v1910
      %v2840 = vmul.f32 %v2351, %v1911
      %v2841 = vmul.f32 %v2355, %v1912
      %v2842 = vmul.f32 %v2359, %v1913
      %v2843 = vmul.f32 %v2363, %v1914
      %v2844 = vmul.f32 %v2367, %v1915
      %v2845 = vmul.f32 %v2371, %v1916
      %v2846 = vmul.f32 %v2375, %v1917
      %v2847 = vmul.f32 %v2379, %v1918
      %v2848 = vmul.f32 %v2383, %v1919
      %v2849 = vmul.f32 %v2387, %v1920
      %v2850 = vmul.f32 %v2391, %v1921
      %v2851 = vmul.f32 %v2395, %v1922
      %v2852 = vmul.f32 %v2399, %v1923
      %v2853 = vmul.f32 %v2403, %v1924
      %v2854 = vmul.f32 %v2407, %v1925
      %v2855 = vmul.f32 %v2411, %v1926
      %v2856 = vmul.f32 %v2415, %v1927
      %v2857 = vmul.f32 %v2419, %v1928
      %v2858 = vmul.f32 %v2423, %v1929
      %v2859 = vmul.f32 %v2427, %v1930
      %v2860 = vmul.f32 %v2431, %v1931
      %v2861 = vmul.f32 %v2435, %v1932
      %v2862 = vmul.f32 %v2439, %v1933
      %v2863 = vmul.f32 %v2443, %v1934
      %v2864 = vmul.f32 %v2447, %v1935
      %v2865 = vmul.f32 %v2483, %v1906
      %v2866 = vmul.f32 %v2487, %v1907
      %v2867 = vmul.f32 %v2491, %v1908
      %v2868 = vmul.f32 %v2495, %v1909
      %v2869 = vmul.f32 %v2499, %v1910
      %v2870 = vmul.f32 %v2503, %v1911
      %v2871 = vmul.f32 %v2507, %v1912
      %v2872 = vmul.f32 %v2511, %v1913
      %v2873 = vmul.f32 %v2515, %v1914
      %v2874 = vmul.f32 %v2519, %v1915
      %v2875 = vmul.f32 %v2523, %v1916
      %v2876 = vmul.f32 %v2527, %v1917
      %v2877 = vmul.f32 %v2531, %v1918
      %v2878 = vmul.f32 %v2535, %v1919
      %v2879 = vmul.f32 %v2539, %v1920
      %v2880 = vmul.f32 %v2543, %v1921
      %v2881 = vmul.f32 %v2547, %v1922
      %v2882 = vmul.f32 %v2551, %v1923
      %v2883 = vmul.f32 %v2555, %v1924
      %v2884 = vmul.f32 %v2559, %v1925
      %v2885 = vmul.f32 %v2563, %v1926
      %v2886 = vmul.f32 %v2567, %v1927
      %v2887 = vmul.f32 %v2571, %v1928
      %v2888 = vmul.f32 %v2575, %v1929
      %v2889 = vmul.f32 %v2579, %v1930
      %v2890 = vmul.f32 %v2583, %v1931
      %v2891 = vmul.f32 %v2587, %v1932
      %v2892 = vmul.f32 %v2591, %v1933
      %v2893 = vmul.f32 %v2595, %v1934
      %v2894 = vmul.f32 %v2599, %v1935
      %v2895 = vadd.f32 %v2833, %v2865
      %v2896 = vadd.f32 %v2834, %v2866
      %v2897 = vadd.f32 %v2835, %v2867
      %v2898 = vadd.f32 %v2836, %v2868
      %v2899 = vadd.f32 %v2837, %v2869
      %v2900 = vadd.f32 %v2838, %v2870
      %v2901 = vadd.f32 %v2839, %v2871
      %v2902 = vadd.f32 %v2840, %v2872
      %v2903 = vadd.f32 %v2841, %v2873
      %v2904 = vadd.f32 %v2842, %v2874
      %v2905 = vadd.f32 %v2843, %v2875
      %v2906 = vadd.f32 %v2844, %v2876
      %v2907 = vadd.f32 %v2845, %v2877
      %v2908 = vadd.f32 %v2846, %v2878
      %v2909 = vadd.f32 %v2847, %v2879
      %v2910 = vadd.f32 %v2848, %v2880
      %v2911 = vadd.f32 %v2849, %v2881
      %v2912 = vadd.f32 %v2850, %v2882
      %v2913 = vadd.f32 %v2851, %v2883
      %v2914 = vadd.f32 %v2852, %v2884
      %v2915 = vadd.f32 %v2853, %v2885
      %v2916 = vadd.f32 %v2854, %v2886
      %v2917 = vadd.f32 %v2855, %v2887
      %v2918 = vadd.f32 %v2856, %v2888
      %v2919 = vadd.f32 %v2857, %v2889
      %v2920 = vadd.f32 %v2858, %v2890
      %v2921 = vadd.f32 %v2859, %v2891
      %v2922 = vadd.f32 %v2860, %v2892
      %v2923 = vadd.f32 %v2861, %v2893
      %v2924 = vadd.f32 %v2862, %v2894
      %v2925 = vadd.f32 %v2863, %v2639
      %v2926 = vadd.f32 %v2864, %v2640
      %s2927 = scalar_lea.vmem %s251, 768
      %2928 = vst.msk [vmem:[%s2927] sm:$0xff] %vm2288, %v2895
      %2929 = vst.msk [vmem:[%s2927 + $0x8] sm:$0xff] %vm2288, %v2896
      %2930 = vst.msk [vmem:[%s2927 + $0x10] sm:$0xff] %vm2288, %v2897
      %2931 = vst.msk [vmem:[%s2927 + $0x18] sm:$0xff] %vm2288, %v2898
      %2932 = vst.msk [vmem:[%s2927 + $0x20] sm:$0xff] %vm2288, %v2899
      %2933 = vst.msk [vmem:[%s2927 + $0x28] sm:$0xff] %vm2288, %v2900
      %2934 = vst.msk [vmem:[%s2927 + $0x30] sm:$0xff] %vm2288, %v2901
      %2935 = vst.msk [vmem:[%s2927 + $0x38] sm:$0xff] %vm2288, %v2902
      %2936 = vst.msk [vmem:[%s2927 + $0x40] sm:$0xff] %vm2288, %v2903
      %2937 = vst.msk [vmem:[%s2927 + $0x48] sm:$0xff] %vm2288, %v2904
      %2938 = vst.msk [vmem:[%s2927 + $0x50] sm:$0xff] %vm2288, %v2905
      %2939 = vst.msk [vmem:[%s2927 + $0x58] sm:$0xff] %vm2288, %v2906
      %2940 = vst.msk [vmem:[%s2927 + $0x60] sm:$0xff] %vm2288, %v2907
      %2941 = vst.msk [vmem:[%s2927 + $0x68] sm:$0xff] %vm2288, %v2908
      %2942 = vst.msk [vmem:[%s2927 + $0x70] sm:$0xff] %vm2288, %v2909
      %2943 = vst.msk [vmem:[%s2927 + $0x78] sm:$0xff] %vm2288, %v2910
      %2944 = vst.msk [vmem:[%s2927 + $0x80] sm:$0xff] %vm2288, %v2911
      %2945 = vst.msk [vmem:[%s2927 + $0x88] sm:$0xff] %vm2288, %v2912
      %2946 = vst.msk [vmem:[%s2927 + $0x90] sm:$0xff] %vm2288, %v2913
      %2947 = vst.msk [vmem:[%s2927 + $0x98] sm:$0xff] %vm2288, %v2914
      %2948 = vst.msk [vmem:[%s2927 + $0xa0] sm:$0xff] %vm2288, %v2915
      %2949 = vst.msk [vmem:[%s2927 + $0xa8] sm:$0xff] %vm2288, %v2916
      %2950 = vst.msk [vmem:[%s2927 + $0xb0] sm:$0xff] %vm2288, %v2917
      %2951 = vst.msk [vmem:[%s2927 + $0xb8] sm:$0xff] %vm2288, %v2918
      %2952 = vst.msk [vmem:[%s2927 + $0xc0] sm:$0xff] %vm2288, %v2919
      %2953 = vst.msk [vmem:[%s2927 + $0xc8] sm:$0xff] %vm2288, %v2920
      %2954 = vst.msk [vmem:[%s2927 + $0xd0] sm:$0xff] %vm2288, %v2921
      %2955 = vst.msk [vmem:[%s2927 + $0xd8] sm:$0xff] %vm2288, %v2922
      %2956 = vst.msk [vmem:[%s2927 + $0xe0] sm:$0xff] %vm2288, %v2923
      %2957 = vst.msk [vmem:[%s2927 + $0xe8] sm:$0xff] %vm2288, %v2924
      %2958 = vst.msk [vmem:[%s2927 + $0xf0] sm:$0xff] %vm2288, %v2925
      %2959 = vst.msk [vmem:[%s2927 + $0xf8] sm:$0xff] %vm2288, %v2926
      %p2960 = scmp.lt.s32.totalorder %s17, 1
      %s2961 = scalar_select %p2960, %s17, 1
      %s2962 = smul.addr %s2961, 128
      %s2963 = smul.addr %s2962, 8
      %s2964 = scalar_lea.vmem %s6, %s2963
      // Predicated region
      $region45: #{deconv_forward.1} parent=43 // pred_check
        %p2965 = pneg %p166
      $region46: #{deconv_forward.1} parent=43 // pred_check_branch
        %2967 = sbr.rel (%p2965) target = $region48
      $region47: #{deconv_forward.1} parent=43 // pred_region
        _
      $region48: #{deconv_forward.1} parent=43 // pred_fallthru
        _
    $region44: #{deconv_forward.1} parent=5 // pred_fallthru
      _
    %p2968 = scmp.le.s32.totalorder 2, %s12
    // Predicated region
    $region49: #{deconv_forward.1} parent=5 // pred_check
      %p2969 = pneg %p2968
    $region50: #{deconv_forward.1} parent=5 // pred_check_branch
      %2971 = sbr.rel (%p2969) target = $region52
    $region51: #{deconv_forward.1} parent=5 // pred_region
      %s2972 = ssub.s32 %s12, 2
      // Predicated region
      $region53: #{deconv_forward.1} parent=51 // pred_check
        %p2973 = pneg %p172
      $region54: #{deconv_forward.1} parent=51 // pred_check_branch
        %2975 = sbr.rel (%p2973) target = $region56
      $region55: #{deconv_forward.1} parent=51 // pred_region
        %p2976 = scmp.lt.s32.totalorder %s18, 1
        %s2977 = scalar_select %p2976, %s18, 1
        %s2978 = smul.addr %s2977, 128
        %s2979 = smul.addr %s2978, 8
        %s2980 = scalar_lea.vmem %s6, %s2979
      $region56: #{deconv_forward.1} parent=51 // pred_fallthru
        _
    $region52: #{deconv_forward.1} parent=5 // pred_fallthru
      _
  $region6: #{deconv_forward.1} parent=0 // loop_footer
    %s16 = sadd.s32 1, %s12
  $region7: #{deconv_forward.1} parent=0 // loop_footer_branch
    %11 = sbr.rel target = $region3
  $region8: #{deconv_forward.1} parent=0 // loop_exit
    _

</llo_original>
